<compile_context>
chip_gen: v5e
topology: v5e:2x2
jax: 0.10.0
libtpu: 0.0.40
codegen_flags: <defaults>
</compile_context>

<pallas_src>
import functools

import jax
import jax.numpy as jnp
from jax.experimental import pallas as pl
from jax.experimental.pallas import tpu as pltpu

BN_EPS = 1e-3   # BatchNorm2d(eps=0.001)
LANE = 128


def _conv_bn_relu_kernel(x_ref, w_ref, b_ref, o_ref, xp_ref, *,
                         KH, KW, TH, OW, Cin, Cout_p, P, H, W):
    # x_ref  : (1, H, W, Cin)  bf16   one NHWC batch element (unpadded)
    # w_ref  : (KH*KW*Cin, Cout_p) bf16   BN-folded weight, (kh,kw,cin)-major rows
    # b_ref  : (1, Cout_p)  f32       BN-folded bias
    # o_ref  : (1, TH*OW, Cout_p) f32 relu(bn(conv(x))) for TH output rows
    # xp_ref : (H+2P, W+2P, Cin) bf16 scratch: spatially padded image (persists
    #                                 across the row-tile axis t)
    t = pl.program_id(1)

    # Build the zero-padded image in VMEM once per batch element (t == 0).
    @pl.when(t == 0)
    def _():
        if P > 0:
            xp_ref[...] = jnp.zeros_like(xp_ref)
        xp_ref[P:P + H, P:P + W, :] = x_ref[0]

    # Per-tap accumulation: KH*KW small bf16 matmuls accumulated in f32.
    # No lane concatenation / patch-matrix materialization (review item 1).
    row0 = pl.multiple_of(t * TH, TH)
    acc = jnp.zeros((TH * OW, Cout_p), jnp.float32)
    for kh in range(KH):                                   # static unroll
        for kw in range(KW):
            xs = xp_ref[pl.ds(row0 + kh, TH), kw:kw + OW, :]   # (TH, OW, Cin)
            xs = xs.reshape(TH * OW, Cin)
            r0 = (kh * KW + kw) * Cin                      # static row offset
            acc += jnp.dot(xs, w_ref[r0:r0 + Cin, :],
                           preferred_element_type=jnp.float32)

    o_ref[0] = jnp.maximum(acc + b_ref[...], 0.0)


def basic_conv2d_forward(x_nchw, params, *, stride=1, padding=0):
    """relu(batchnorm(conv2d(x)))  -- eval-mode BN (running statistics)."""
    w, gamma, beta, mean, var = params
    N, Cin, H, W = x_nchw.shape
    Cout, Cin_w, KH, KW = w.shape
    assert Cin_w == Cin
    # TODO(synk): stride > 1, dilation and groups are not implemented here.
    assert stride == 1, "kernel implements stride=1 convolutions"
    OH = H + 2 * padding - KH + 1
    OW = W + 2 * padding - KW + 1

    # ---- Fold eval-mode BatchNorm into the conv weight / bias (exact, f32). --
    scale = gamma * jax.lax.rsqrt(var + BN_EPS)                  # (Cout,)
    w_f = w * scale[:, None, None, None]                         # (Cout,Cin,KH,KW)
    b_f = beta - mean * scale                                    # (Cout,)

    # (Cout,Cin,KH,KW) -> (KH*KW*Cin, Cout), rows in (kh,kw,cin)-major order to
    # match the in-kernel tap slicing; cast to bf16, pad Cout to 128 lanes.
    w_mat = jnp.transpose(w_f, (2, 3, 1, 0)).reshape(KH * KW * Cin, Cout)
    Cout_p = ((Cout + LANE - 1) // LANE) * LANE
    w_mat = jnp.pad(w_mat.astype(jnp.bfloat16), ((0, 0), (0, Cout_p - Cout)))
    b_row = jnp.pad(b_f, (0, Cout_p - Cout)).reshape(1, Cout_p).astype(jnp.float32)

    # NCHW -> NHWC (channels on lanes), bf16 activations.  No HBM jnp.pad: the
    # spatial padding is done inside the kernel.
    x = jnp.transpose(x_nchw, (0, 2, 3, 1)).astype(jnp.bfloat16)
    Hp, Wp = H + 2 * padding, W + 2 * padding

    # Output-row tile (spatial grid axis).
    TH = 8 if OH % 8 == 0 else OH
    T = OH // TH

    kernel = functools.partial(_conv_bn_relu_kernel, KH=KH, KW=KW, TH=TH,
                               OW=OW, Cin=Cin, Cout_p=Cout_p, P=padding,
                               H=H, W=W)

    out = pl.pallas_call(
        kernel,
        out_shape=jax.ShapeDtypeStruct((N, OH * OW, Cout_p), jnp.float32),
        grid=(N, T),
        in_specs=[
            # Image block is t-invariant -> DMA'd once per batch element.
            pl.BlockSpec((1, H, W, Cin), lambda n, t: (n, 0, 0, 0)),
            # Weight / bias are grid-invariant -> stay resident in VMEM.
            pl.BlockSpec((KH * KW * Cin, Cout_p), lambda n, t: (0, 0)),
            pl.BlockSpec((1, Cout_p), lambda n, t: (0, 0)),
        ],
        out_specs=pl.BlockSpec((1, TH * OW, Cout_p), lambda n, t: (n, t, 0)),
        scratch_shapes=[pltpu.VMEM((Hp, Wp, Cin), jnp.bfloat16)],
        compiler_params=pltpu.CompilerParams(
            dimension_semantics=("parallel", "arbitrary")),
    )(x, w_mat, b_row)

    # (N, OH*OW, Cout_p) -> (N, Cout, OH, OW)
    out = out[:, :, :Cout].reshape(N, OH, OW, Cout)
    return jnp.transpose(out, (0, 3, 1, 2))


if __name__ == "__main__":
    key = jax.random.PRNGKey(0)
    kx, kw_, kg, kb, km, kv = jax.random.split(key, 6)

    # Small, module-consistent shapes: BasicConv2d(32 -> 64, kernel_size=3, padding=1)
    N, Cin, H, W = 2, 32, 16, 16
    Cout, KH, KW, padding = 64, 3, 3, 1

    x = jax.random.normal(kx, (N, Cin, H, W), jnp.float32)
    w = 0.1 * jax.random.normal(kw_, (Cout, Cin, KH, KW), jnp.float32)
    gamma = 1.0 + 0.1 * jax.random.normal(kg, (Cout,), jnp.float32)
    beta = 0.1 * jax.random.normal(kb, (Cout,), jnp.float32)
    mean = 0.1 * jax.random.normal(km, (Cout,), jnp.float32)
    var = jnp.abs(1.0 + 0.1 * jax.random.normal(kv, (Cout,), jnp.float32))
    params = (w, gamma, beta, mean, var)

    # TODO(synk): BatchNorm is modeled in eval mode (running stats); training-mode
    # batch statistics are not reproduced.
    forward = jax.jit(functools.partial(basic_conv2d_forward, padding=padding))
    out = jax.block_until_ready(forward(x, params))
    assert out.shape == (N, Cout, H, W) and out.dtype == jnp.float32

    # Pure-JAX reference with the same bf16 rounding of x and the folded weight
    # (the kernel accumulates bf16 products in f32, so this matches tightly).
    scale = gamma * jax.lax.rsqrt(var + BN_EPS)
    w_fold = (w * scale[:, None, None, None]).astype(jnp.bfloat16).astype(jnp.float32)
    b_fold = beta - mean * scale
    x_r = x.astype(jnp.bfloat16).astype(jnp.float32)
    conv = jax.lax.conv_general_dilated(
        x_r, w_fold, window_strides=(1, 1), padding=[(padding, padding)] * 2,
        dimension_numbers=("NCHW", "OIHW", "NCHW"),
        precision=jax.lax.Precision.HIGHEST)
    ref = jnp.maximum(conv + b_fold[None, :, None, None], 0.0)
    assert jnp.allclose(out, ref, rtol=2e-3, atol=2e-3), \
        float(jnp.max(jnp.abs(out - ref)))

    print("KERNEL_OK")
</pallas_src>

<mosaic_0001>
module attributes {stable_mosaic.version = 11 : i64} {
  func.func @_conv_bn_relu_kernel(%arg0: i32, %arg1: i32, %arg2: memref<1x16x16x32xbf16, #tpu.memory_space<vmem>>, %arg3: memref<288x128xbf16, #tpu.memory_space<vmem>>, %arg4: memref<1x128xf32, #tpu.memory_space<vmem>>, %arg5: memref<1x128x128xf32, #tpu.memory_space<vmem>>, %arg6: memref<18x18x32xbf16, #tpu.memory_space<vmem>>) attributes {dimension_semantics = [#tpu.dimension_semantics<parallel>, #tpu.dimension_semantics<arbitrary>], iteration_bounds = array<i64: 2, 2>, scalar_prefetch = 0 : i64, scratch_operands = 1 : i64, tpu.core_type = #tpu.core_type<tc>, window_params = [{transform_indices = @transform_0, window_bounds = array<i64: 1, 16, 16, 32>}, {pipeline_mode = #tpu.pipeline_mode<synchronous>, transform_indices = @transform_1, window_bounds = array<i64: 288, 128>}, {pipeline_mode = #tpu.pipeline_mode<synchronous>, transform_indices = @transform_2, window_bounds = array<i64: 1, 128>}, {transform_indices = @transform_3, window_bounds = array<i64: 1, 128, 128>}]} {
    %c0_i32 = arith.constant 0 : i32
    %0 = arith.cmpi eq, %arg1, %c0_i32 : i32
    %1 = arith.extui %0 : i1 to i32
    %c0_i32_0 = arith.constant 0 : i32
    %2 = arith.cmpi ne, %1, %c0_i32_0 : i32
    scf.if %2 {
      %cst_48 = arith.constant 0.000000e+00 : bf16
      %77 = vector.broadcast %cst_48 : bf16 to vector<18x18x32xbf16>
      %c0_49 = arith.constant 0 : index
      %c0_50 = arith.constant 0 : index
      %c0_51 = arith.constant 0 : index
      %78 = vector.load %arg6[%c0_49, %c0_50, %c0_51] : memref<18x18x32xbf16, #tpu.memory_space<vmem>>, vector<18x18x32xbf16>
      tpu.vector_store %arg6[%c0_49, %c0_50, %c0_51], %77 {strides = array<i32>} : memref<18x18x32xbf16, #tpu.memory_space<vmem>>, vector<18x18x32xbf16>,
      %c0_52 = arith.constant 0 : index
      %c0_53 = arith.constant 0 : index
      %c0_54 = arith.constant 0 : index
      %c0_55 = arith.constant 0 : index
      %79 = vector.load %arg2[%c0_52, %c0_53, %c0_54, %c0_55] : memref<1x16x16x32xbf16, #tpu.memory_space<vmem>>, vector<1x16x16x32xbf16>
      %80 = vector.shape_cast %79 : vector<1x16x16x32xbf16> to vector<16x16x32xbf16>
      %c1_56 = arith.constant 1 : index
      %c1_57 = arith.constant 1 : index
      %c0_58 = arith.constant 0 : index
      %81 = vector.load %arg6[%c1_56, %c1_57, %c0_58] : memref<18x18x32xbf16, #tpu.memory_space<vmem>>, vector<16x16x32xbf16>
      tpu.vector_store %arg6[%c1_56, %c1_57, %c0_58], %80 {strides = array<i32>} : memref<18x18x32xbf16, #tpu.memory_space<vmem>>, vector<16x16x32xbf16>,
    } else {
    }
    %c8_i32 = arith.constant 8 : i32
    %3 = arith.muli %arg1, %c8_i32 : i32
    %4 = tpu.assume_multiple %3, 8 : i32
    %cst = arith.constant 0.000000e+00 : f32
    %5 = vector.broadcast %cst : f32 to vector<128x128xf32>
    %c0_i32_1 = arith.constant 0 : i32
    %6 = arith.addi %4, %c0_i32_1 : i32
    %7 = arith.index_cast %6 : i32 to index
    %c0 = arith.constant 0 : index
    %c0_2 = arith.constant 0 : index
    %8 = vector.load %arg6[%7, %c0, %c0_2] : memref<18x18x32xbf16, #tpu.memory_space<vmem>>, vector<8x16x32xbf16>
    %9 = vector.shape_cast %8 : vector<8x16x32xbf16> to vector<128x32xbf16>
    %c0_3 = arith.constant 0 : index
    %c0_4 = arith.constant 0 : index
    %10 = vector.load %arg3[%c0_3, %c0_4] : memref<288x128xbf16, #tpu.memory_space<vmem>>, vector<32x128xbf16>
    %cst_5 = arith.constant dense<0.000000e+00> : vector<128x128xf32>
    %11 = tpu.matmul %9, %10, %cst_5 {dimension_numbers = #tpu.dot_dimension_numbers<[1], [0], [0], [1], [0, 0, 1, 1], [], []>} : vector<128x32xbf16>, vector<32x128xbf16>, vector<128x128xf32> -> vector<128x128xf32>
    %12 = arith.addf %5, %11 : vector<128x128xf32>
    %c0_i32_6 = arith.constant 0 : i32
    %13 = arith.addi %4, %c0_i32_6 : i32
    %14 = arith.index_cast %13 : i32 to index
    %c1 = arith.constant 1 : index
    %c0_7 = arith.constant 0 : index
    %15 = vector.load %arg6[%14, %c1, %c0_7] : memref<18x18x32xbf16, #tpu.memory_space<vmem>>, vector<8x16x32xbf16>
    %16 = vector.shape_cast %15 : vector<8x16x32xbf16> to vector<128x32xbf16>
    %c32 = arith.constant 32 : index
    %c0_8 = arith.constant 0 : index
    %17 = vector.load %arg3[%c32, %c0_8] : memref<288x128xbf16, #tpu.memory_space<vmem>>, vector<32x128xbf16>
    %cst_9 = arith.constant dense<0.000000e+00> : vector<128x128xf32>
    %18 = tpu.matmul %16, %17, %cst_9 {dimension_numbers = #tpu.dot_dimension_numbers<[1], [0], [0], [1], [0, 0, 1, 1], [], []>} : vector<128x32xbf16>, vector<32x128xbf16>, vector<128x128xf32> -> vector<128x128xf32>
    %19 = arith.addf %12, %18 : vector<128x128xf32>
    %c0_i32_10 = arith.constant 0 : i32
    %20 = arith.addi %4, %c0_i32_10 : i32
    %21 = arith.index_cast %20 : i32 to index
    %c2 = arith.constant 2 : index
    %c0_11 = arith.constant 0 : index
    %22 = vector.load %arg6[%21, %c2, %c0_11] : memref<18x18x32xbf16, #tpu.memory_space<vmem>>, vector<8x16x32xbf16>
    %23 = vector.shape_cast %22 : vector<8x16x32xbf16> to vector<128x32xbf16>
    %c64 = arith.constant 64 : index
    %c0_12 = arith.constant 0 : index
    %24 = vector.load %arg3[%c64, %c0_12] : memref<288x128xbf16, #tpu.memory_space<vmem>>, vector<32x128xbf16>
    %cst_13 = arith.constant dense<0.000000e+00> : vector<128x128xf32>
    %25 = tpu.matmul %23, %24, %cst_13 {dimension_numbers = #tpu.dot_dimension_numbers<[1], [0], [0], [1], [0, 0, 1, 1], [], []>} : vector<128x32xbf16>, vector<32x128xbf16>, vector<128x128xf32> -> vector<128x128xf32>
    %26 = arith.addf %19, %25 : vector<128x128xf32>
    %c1_i32 = arith.constant 1 : i32
    %27 = arith.addi %4, %c1_i32 : i32
    %28 = arith.index_cast %27 : i32 to index
    %c0_14 = arith.constant 0 : index
    %c0_15 = arith.constant 0 : index
    %29 = vector.load %arg6[%28, %c0_14, %c0_15] : memref<18x18x32xbf16, #tpu.memory_space<vmem>>, vector<8x16x32xbf16>
    %30 = vector.shape_cast %29 : vector<8x16x32xbf16> to vector<128x32xbf16>
    %c96 = arith.constant 96 : index
    %c0_16 = arith.constant 0 : index
    %31 = vector.load %arg3[%c96, %c0_16] : memref<288x128xbf16, #tpu.memory_space<vmem>>, vector<32x128xbf16>
    %cst_17 = arith.constant dense<0.000000e+00> : vector<128x128xf32>
    %32 = tpu.matmul %30, %31, %cst_17 {dimension_numbers = #tpu.dot_dimension_numbers<[1], [0], [0], [1], [0, 0, 1, 1], [], []>} : vector<128x32xbf16>, vector<32x128xbf16>, vector<128x128xf32> -> vector<128x128xf32>
    %33 = arith.addf %26, %32 : vector<128x128xf32>
    %c1_i32_18 = arith.constant 1 : i32
    %34 = arith.addi %4, %c1_i32_18 : i32
    %35 = arith.index_cast %34 : i32 to index
    %c1_19 = arith.constant 1 : index
    %c0_20 = arith.constant 0 : index
    %36 = vector.load %arg6[%35, %c1_19, %c0_20] : memref<18x18x32xbf16, #tpu.memory_space<vmem>>, vector<8x16x32xbf16>
    %37 = vector.shape_cast %36 : vector<8x16x32xbf16> to vector<128x32xbf16>
    %c128 = arith.constant 128 : index
    %c0_21 = arith.constant 0 : index
    %38 = vector.load %arg3[%c128, %c0_21] : memref<288x128xbf16, #tpu.memory_space<vmem>>, vector<32x128xbf16>
    %cst_22 = arith.constant dense<0.000000e+00> : vector<128x128xf32>
    %39 = tpu.matmul %37, %38, %cst_22 {dimension_numbers = #tpu.dot_dimension_numbers<[1], [0], [0], [1], [0, 0, 1, 1], [], []>} : vector<128x32xbf16>, vector<32x128xbf16>, vector<128x128xf32> -> vector<128x128xf32>
    %40 = arith.addf %33, %39 : vector<128x128xf32>
    %c1_i32_23 = arith.constant 1 : i32
    %41 = arith.addi %4, %c1_i32_23 : i32
    %42 = arith.index_cast %41 : i32 to index
    %c2_24 = arith.constant 2 : index
    %c0_25 = arith.constant 0 : index
    %43 = vector.load %arg6[%42, %c2_24, %c0_25] : memref<18x18x32xbf16, #tpu.memory_space<vmem>>, vector<8x16x32xbf16>
    %44 = vector.shape_cast %43 : vector<8x16x32xbf16> to vector<128x32xbf16>
    %c160 = arith.constant 160 : index
    %c0_26 = arith.constant 0 : index
    %45 = vector.load %arg3[%c160, %c0_26] : memref<288x128xbf16, #tpu.memory_space<vmem>>, vector<32x128xbf16>
    %cst_27 = arith.constant dense<0.000000e+00> : vector<128x128xf32>
    %46 = tpu.matmul %44, %45, %cst_27 {dimension_numbers = #tpu.dot_dimension_numbers<[1], [0], [0], [1], [0, 0, 1, 1], [], []>} : vector<128x32xbf16>, vector<32x128xbf16>, vector<128x128xf32> -> vector<128x128xf32>
    %47 = arith.addf %40, %46 : vector<128x128xf32>
    %c2_i32 = arith.constant 2 : i32
    %48 = arith.addi %4, %c2_i32 : i32
    %49 = arith.index_cast %48 : i32 to index
    %c0_28 = arith.constant 0 : index
    %c0_29 = arith.constant 0 : index
    %50 = vector.load %arg6[%49, %c0_28, %c0_29] : memref<18x18x32xbf16, #tpu.memory_space<vmem>>, vector<8x16x32xbf16>
    %51 = vector.shape_cast %50 : vector<8x16x32xbf16> to vector<128x32xbf16>
    %c192 = arith.constant 192 : index
    %c0_30 = arith.constant 0 : index
    %52 = vector.load %arg3[%c192, %c0_30] : memref<288x128xbf16, #tpu.memory_space<vmem>>, vector<32x128xbf16>
    %cst_31 = arith.constant dense<0.000000e+00> : vector<128x128xf32>
    %53 = tpu.matmul %51, %52, %cst_31 {dimension_numbers = #tpu.dot_dimension_numbers<[1], [0], [0], [1], [0, 0, 1, 1], [], []>} : vector<128x32xbf16>, vector<32x128xbf16>, vector<128x128xf32> -> vector<128x128xf32>
    %54 = arith.addf %47, %53 : vector<128x128xf32>
    %c2_i32_32 = arith.constant 2 : i32
    %55 = arith.addi %4, %c2_i32_32 : i32
    %56 = arith.index_cast %55 : i32 to index
    %c1_33 = arith.constant 1 : index
    %c0_34 = arith.constant 0 : index
    %57 = vector.load %arg6[%56, %c1_33, %c0_34] : memref<18x18x32xbf16, #tpu.memory_space<vmem>>, vector<8x16x32xbf16>
    %58 = vector.shape_cast %57 : vector<8x16x32xbf16> to vector<128x32xbf16>
    %c224 = arith.constant 224 : index
    %c0_35 = arith.constant 0 : index
    %59 = vector.load %arg3[%c224, %c0_35] : memref<288x128xbf16, #tpu.memory_space<vmem>>, vector<32x128xbf16>
    %cst_36 = arith.constant dense<0.000000e+00> : vector<128x128xf32>
    %60 = tpu.matmul %58, %59, %cst_36 {dimension_numbers = #tpu.dot_dimension_numbers<[1], [0], [0], [1], [0, 0, 1, 1], [], []>} : vector<128x32xbf16>, vector<32x128xbf16>, vector<128x128xf32> -> vector<128x128xf32>
    %61 = arith.addf %54, %60 : vector<128x128xf32>
    %c2_i32_37 = arith.constant 2 : i32
    %62 = arith.addi %4, %c2_i32_37 : i32
    %63 = arith.index_cast %62 : i32 to index
    %c2_38 = arith.constant 2 : index
    %c0_39 = arith.constant 0 : index
    %64 = vector.load %arg6[%63, %c2_38, %c0_39] : memref<18x18x32xbf16, #tpu.memory_space<vmem>>, vector<8x16x32xbf16>
    %65 = vector.shape_cast %64 : vector<8x16x32xbf16> to vector<128x32xbf16>
    %c256 = arith.constant 256 : index
    %c0_40 = arith.constant 0 : index
    %66 = vector.load %arg3[%c256, %c0_40] : memref<288x128xbf16, #tpu.memory_space<vmem>>, vector<32x128xbf16>
    %cst_41 = arith.constant dense<0.000000e+00> : vector<128x128xf32>
    %67 = tpu.matmul %65, %66, %cst_41 {dimension_numbers = #tpu.dot_dimension_numbers<[1], [0], [0], [1], [0, 0, 1, 1], [], []>} : vector<128x32xbf16>, vector<32x128xbf16>, vector<128x128xf32> -> vector<128x128xf32>
    %68 = arith.addf %61, %67 : vector<128x128xf32>
    %c0_42 = arith.constant 0 : index
    %c0_43 = arith.constant 0 : index
    %69 = vector.load %arg4[%c0_42, %c0_43] : memref<1x128xf32, #tpu.memory_space<vmem>>, vector<1x128xf32>
    %70 = vector.broadcast %69 : vector<1x128xf32> to vector<128x128xf32>
    %71 = arith.addf %68, %70 : vector<128x128xf32>
    %cst_44 = arith.constant 0.000000e+00 : f32
    %72 = vector.broadcast %cst_44 : f32 to vector<128x128xf32>
    %73 = arith.maximumf %71, %72 : vector<128x128xf32>
    %c0_45 = arith.constant 0 : index
    %c0_46 = arith.constant 0 : index
    %c0_47 = arith.constant 0 : index
    %74 = vector.load %arg5[%c0_45, %c0_46, %c0_47] : memref<1x128x128xf32, #tpu.memory_space<vmem>>, vector<1x128x128xf32>
    %75 = vector.shape_cast %74 : vector<1x128x128xf32> to vector<128x128xf32>
    %76 = vector.shape_cast %73 : vector<128x128xf32> to vector<1x128x128xf32>
    tpu.vector_store %arg5[%c0_45, %c0_46, %c0_47], %76 {strides = array<i32>} : memref<1x128x128xf32, #tpu.memory_space<vmem>>, vector<1x128x128xf32>,
    return
  }
  func.func @transform_0(%arg0: i32, %arg1: i32) -> (i32, i32, i32, i32) {
    %c0_i32 = arith.constant 0 : i32
    %c0_i32_0 = arith.constant 0 : i32
    %c0_i32_1 = arith.constant 0 : i32
    %c0_i32_2 = arith.constant 0 : i32
    return %arg0, %c0_i32, %c0_i32_0, %c0_i32_1 : i32, i32, i32, i32
  }
  func.func @transform_1(%arg0: i32, %arg1: i32) -> (i32, i32) {
    %c0_i32 = arith.constant 0 : i32
    %c0_i32_0 = arith.constant 0 : i32
    %c0_i32_1 = arith.constant 0 : i32
    return %c0_i32, %c0_i32_0 : i32, i32
  }
  func.func @transform_2(%arg0: i32, %arg1: i32) -> (i32, i32) {
    %c0_i32 = arith.constant 0 : i32
    %c0_i32_0 = arith.constant 0 : i32
    %c0_i32_1 = arith.constant 0 : i32
    return %c0_i32, %c0_i32_0 : i32, i32
  }
  func.func @transform_3(%arg0: i32, %arg1: i32) -> (i32, i32, i32) {
    %c0_i32 = arith.constant 0 : i32
    %c0_i32_0 = arith.constant 0 : i32
    return %arg0, %arg1, %c0_i32 : i32, i32, i32
  }
}

</mosaic_0001>

<llo_original>
// kernel: basic_conv2d_forward.1
$region0: #{basic_conv2d_forward.1}
  #allocation0 [shape = 'u32[]', space=smem, size = 0x4, offset = 0x4, fixed_abs, tag = 'smem constant byte address 0x4 - core index']
  #allocation1 [shape = 'u32[72,128]{1,0:T(1,128)}', space=vmem, size = 0x9000, scoped, tag = 'internal scratch']
  #allocation2 [shape = 'bf16[18,18,32]{2,1,0:T(8,128)(2,1)}', space=vmem, size = 0x1b000, scoped, tag = 'scratch operand']
  %s0 = inlined_call_operand.vmem [shape: bf16[2,16,16,32], index: 0, kind: input, shape index: {}]
  %s1 = inlined_call_operand.vmem [shape: bf16[288,128], index: 1, kind: input, shape index: {}]
  %s2 = inlined_call_operand.vmem [shape: f32[1,128], index: 2, kind: input, shape index: {}]
  %s3 = inlined_call_operand.hbm [shape: f32[2,256,128], index: 3, kind: output, shape index: {}]
  %s4 = sld [smem:[#allocation0]]
  $region49: #{basic_conv2d_forward.1} parent=0
    _
  %s6 = ssub.s32 1, %s4
  %s7 = scalar_select 0, %s6, %s4
  $region1: #{basic_conv2d_forward.1} parent=0
    #allocation3 [shape = 'u8[131072]{0}', space=vmem, size = 0x20000, scoped, tag = 'output window, operand 0']
    #allocation4 [shape = 's32[2]{0}', space=sflag, size = 0x8, scoped, tag = 'scoped memory for basic_conv2d_forward.1']
    %8 = vsyncpa [#allocation4], 0
    %s9 = scalar_lea.sflag [#allocation4], 1
    %10 = vsyncpa %s9, 0
    loop: start=0, step=1, limit=6
    $region2: #{basic_conv2d_forward.1} parent=1 // loop_pre_header
      _
    $region3: #{basic_conv2d_forward.1} parent=1 // loop_header
      %s12 = sphi 0, %s16
      %p13 = scmp.ge.s32.totalorder %s12, 6
      %s19 = sphi 0, %s31
      %s20 = sphi 0, %s27
      %s21 = sphi 0, %s19
      %s22 = sphi 0, %s20
      %s23 = sphi 0, %s21
      %s24 = sphi 0, %s22
      %s34 = sphi 0, %s36
      %s37 = sphi 0, %s34
      %s38 = sphi 0, %s37
      %s54 = sphi 0, %s38
      %s58 = sphi 0, %s58
      %s60 = sphi 0, %s58
      %s61 = sphi 0, %s60
      %s75 = sphi 0, %s61
      %s79 = sphi 0, %s79
      %s81 = sphi 0, %s79
      %s82 = sphi 0, %s81
      %s96 = sphi 0, %s82
      %s104 = sphi 0, %s106
      %s107 = sphi 0, %s104
      %s108 = sphi 0, %s107
      %s124 = sphi 0, %s108
    $region4: #{basic_conv2d_forward.1} parent=1 // loop_header_branch
      %15 = sbr.rel (%p13) target = $region8
    $region5: #{basic_conv2d_forward.1} parent=1 // loop_body
      %s17 = ssub.s32 %s12, 1
      %s18 = ssub.s32 %s12, 2
      %s25 = sadd.s32 1, %s20
      %p26 = scmp.ge.s32.totalorder %s25, 2
      %s27 = scalar_select %p26, 0, %s25
      %s28 = sadd.s32 1, %s19
      %s29 = scalar_select %p26, %s28, %s19
      %p30 = scmp.ge.s32.totalorder %s29, 2
      %s31 = scalar_select %p30, 0, %s29
      %s32 = ssub.s32 %s19, %s31
      %p33 = scmp.eq.s32.totalorder %s32, 0
      %s35 = sadd.s32 %s34, 1
      %s36 = scalar_select %p33, %s34, %s35
      %p39 = pneg %p33
      %p40 = scmp.eq.s32.totalorder %s12, 3
      %p41 = por %p39, %p40
      %p42 = scmp.ne.s32.totalorder %s34, %s37
      %p43 = scmp.eq.s32.totalorder %s12, 0
      %p44 = por %p42, %p43
      %p45 = scmp.ne.s32.totalorder %s34, %s37
      %p46 = scmp.eq.s32.totalorder %s17, 3
      %p47 = por %p45, %p46
      %p48 = scmp.ne.s32.totalorder %s37, %s38
      %p49 = scmp.eq.s32.totalorder %s17, 0
      %p50 = por %p48, %p49
      %p51 = scmp.ne.s32.totalorder %s37, %s38
      %p52 = scmp.eq.s32.totalorder %s18, 3
      %p53 = por %p51, %p52
      %p55 = scmp.ne.s32.totalorder %s38, %s54
      %p56 = scmp.eq.s32.totalorder %s18, 0
      %p57 = por %p55, %p56
      %s59 = sadd.s32 %s58, 1
      %p62 = scmp.eq.s32.totalorder %s12, 3
      %p63 = scmp.ne.s32.totalorder %s58, %s60
      %p64 = scmp.eq.s32.totalorder %s12, 0
      %p65 = por %p63, %p64
      %p66 = scmp.ne.s32.totalorder %s58, %s60
      %p67 = scmp.eq.s32.totalorder %s17, 3
      %p68 = por %p66, %p67
      %p69 = scmp.ne.s32.totalorder %s60, %s61
      %p70 = scmp.eq.s32.totalorder %s17, 0
      %p71 = por %p69, %p70
      %p72 = scmp.ne.s32.totalorder %s60, %s61
      %p73 = scmp.eq.s32.totalorder %s18, 3
      %p74 = por %p72, %p73
      %p76 = scmp.ne.s32.totalorder %s61, %s75
      %p77 = scmp.eq.s32.totalorder %s18, 0
      %p78 = por %p76, %p77
      %s80 = sadd.s32 %s79, 1
      %p83 = scmp.eq.s32.totalorder %s12, 3
      %p84 = scmp.ne.s32.totalorder %s79, %s81
      %p85 = scmp.eq.s32.totalorder %s12, 0
      %p86 = por %p84, %p85
      %p87 = scmp.ne.s32.totalorder %s79, %s81
      %p88 = scmp.eq.s32.totalorder %s17, 3
      %p89 = por %p87, %p88
      %p90 = scmp.ne.s32.totalorder %s81, %s82
      %p91 = scmp.eq.s32.totalorder %s17, 0
      %p92 = por %p90, %p91
      %p93 = scmp.ne.s32.totalorder %s81, %s82
      %p94 = scmp.eq.s32.totalorder %s18, 3
      %p95 = por %p93, %p94
      %p97 = scmp.ne.s32.totalorder %s82, %s96
      %p98 = scmp.eq.s32.totalorder %s18, 0
      %p99 = por %p97, %p98
      %s100 = ssub.s32 %s19, %s31
      %s101 = ssub.s32 %s20, %s27
      %s102 = sor.u32 %s100, %s101
      %p103 = scmp.eq.s32.totalorder %s102, 0
      %s105 = sadd.s32 %s104, 1
      %s106 = scalar_select %p103, %s104, %s105
      %p109 = pneg %p103
      %p110 = scmp.eq.s32.totalorder %s12, 3
      %p111 = por %p109, %p110
      %p112 = scmp.ne.s32.totalorder %s104, %s107
      %p113 = scmp.eq.s32.totalorder %s12, 0
      %p114 = por %p112, %p113
      %p115 = scmp.ne.s32.totalorder %s104, %s107
      %p116 = scmp.eq.s32.totalorder %s17, 3
      %p117 = por %p115, %p116
      %p118 = scmp.ne.s32.totalorder %s107, %s108
      %p119 = scmp.eq.s32.totalorder %s17, 0
      %p120 = por %p118, %p119
      %p121 = scmp.ne.s32.totalorder %s107, %s108
      %p122 = scmp.eq.s32.totalorder %s18, 3
      %p123 = por %p121, %p122
      %p125 = scmp.ne.s32.totalorder %s108, %s124
      %p126 = scmp.eq.s32.totalorder %s18, 0
      %p127 = por %p125, %p126
      %p128 = scmp.le.s32.totalorder 1, %s12
      %p129 = scmp.lt.s32.totalorder %s12, 5
      %p130 = pnand %p128, %p129
      %p131 = pneg %p130
      // Predicated region
      $region9: #{basic_conv2d_forward.1} parent=5 // pred_check
        _
      $region10: #{basic_conv2d_forward.1} parent=5 // pred_check_branch
        %133 = sbr.rel (%p130) target = $region12
      $region11: #{basic_conv2d_forward.1} parent=5 // pred_region
        %s134 = ssub.s32 %s12, 1
        // Predicated region
        $region13: #{basic_conv2d_forward.1} parent=11 // pred_check
          %p135 = pneg %p71
        $region14: #{basic_conv2d_forward.1} parent=11 // pred_check_branch
          %137 = sbr.rel (%p135) target = $region16
        $region15: #{basic_conv2d_forward.1} parent=11 // pred_region
          _
        $region16: #{basic_conv2d_forward.1} parent=11 // pred_fallthru
          _
        // Predicated region
        $region17: #{basic_conv2d_forward.1} parent=11 // pred_check
          %p138 = pneg %p92
        $region18: #{basic_conv2d_forward.1} parent=11 // pred_check_branch
          %140 = sbr.rel (%p138) target = $region20
        $region19: #{basic_conv2d_forward.1} parent=11 // pred_region
          _
        $region20: #{basic_conv2d_forward.1} parent=11 // pred_fallthru
          _
      $region12: #{basic_conv2d_forward.1} parent=5 // pred_fallthru
        _
      %p141 = scmp.lt.s32.totalorder %s12, 4
      // Predicated region
      $region21: #{basic_conv2d_forward.1} parent=5 // pred_check
        %p142 = pneg %p141
      $region22: #{basic_conv2d_forward.1} parent=5 // pred_check_branch
        %144 = sbr.rel (%p142) target = $region24
      $region23: #{basic_conv2d_forward.1} parent=5 // pred_region
        // Predicated region
        $region25: #{basic_conv2d_forward.1} parent=23 // pred_check
          %p145 = pneg %p44
        $region26: #{basic_conv2d_forward.1} parent=23 // pred_check_branch
          %147 = sbr.rel (%p145) target = $region28
        $region27: #{basic_conv2d_forward.1} parent=23 // pred_region
          %p148 = scmp.lt.s32.totalorder %s19, 1
          %s149 = scalar_select %p148, %s19, 1
          %s150 = smul.addr %s149, 32
          %s151 = smul.addr %s150, 4
          %s152 = scalar_lea.vmem %s0, %s151
        $region28: #{basic_conv2d_forward.1} parent=23 // pred_fallthru
          _
      $region24: #{basic_conv2d_forward.1} parent=5 // pred_fallthru
        _
      %p153 = scmp.le.s32.totalorder 1, %s12
      %p154 = scmp.lt.s32.totalorder %s12, 5
      %p155 = pnand %p153, %p154
      %p156 = pneg %p155
      // Predicated region
      $region29: #{basic_conv2d_forward.1} parent=5 // pred_check
        _
      $region30: #{basic_conv2d_forward.1} parent=5 // pred_check_branch
        %158 = sbr.rel (%p155) target = $region32
      $region31: #{basic_conv2d_forward.1} parent=5 // pred_region
        %s159 = ssub.s32 %s12, 1
        %p160 = scmp.lt.s32.totalorder %s21, 1
        %s161 = scalar_select %p160, %s21, 1
        %s162 = smul.addr %s161, 32
        %s163 = smul.addr %s162, 4
        %s164 = scalar_lea.vmem %s0, %s163
        %p165 = pneg %p50
        %p166 = pneg %p47
        %p167 = pneg %p71
        %p168 = pneg %p68
        %p169 = pneg %p92
        %p170 = pneg %p89
        %p171 = pneg %p120
        %p172 = pneg %p117
        %s173 = sand.u32 %s107, 1
        %s174 = scalar_lea.sflag [#allocation4], %s173
        %s175 = sand.u32 %s107, 1
        %s176 = smul.addr %s175, 128
        %s177 = scalar_lea.vmem [#allocation3], %s176
        %p178 = scmp.lt.s32.totalorder %s21, 1
        %s179 = scalar_select %p178, %s21, 1
        %s180 = smul.addr %s179, 32
        %s181 = smul.addr %s180, 4
        %s182 = scalar_lea.vmem %s0, %s181
        %s183 = smul.u32 16, %s22
        %p185 = scmp.eq.s32.totalorder %s22, 0
        // Predicated region
        $region33: #{basic_conv2d_forward.1} parent=31 // pred_check
          %p186 = pneg %p185
        $region34: #{basic_conv2d_forward.1} parent=31 // pred_check_branch
          %188 = sbr.rel (%p186) target = $region36
        $region35: #{basic_conv2d_forward.1} parent=31 // pred_region
          %vm189 = vcmask 257024
          %190 = vst.msk [vmem:[#allocation2] sm:$0xf] %vm189, 0
          %191 = vst.msk [vmem:[#allocation2 + $0x4] sm:$0xf] %vm189, 0
          %vm192 = vcmask 253952
          %193 = vst.msk [vmem:[#allocation2 + $0x8] sm:$0x1] %vm192, 0
          %194 = vst.msk [vmem:[#allocation2 + $0xc] sm:$0xf] %vm189, 0
          %195 = vst.msk [vmem:[#allocation2 + $0x10] sm:$0xf] %vm189, 0
          %196 = vst.msk [vmem:[#allocation2 + $0x14] sm:$0x1] %vm192, 0
          %197 = vst.msk [vmem:[#allocation2 + $0x18] sm:$0xf] %vm189, 0
          %198 = vst.msk [vmem:[#allocation2 + $0x1c] sm:$0xf] %vm189, 0
          %199 = vst.msk [vmem:[#allocation2 + $0x20] sm:$0x1] %vm192, 0
          %200 = vst.msk [vmem:[#allocation2 + $0x24] sm:$0xf] %vm189, 0
          %201 = vst.msk [vmem:[#allocation2 + $0x28] sm:$0xf] %vm189, 0
          %202 = vst.msk [vmem:[#allocation2 + $0x2c] sm:$0x1] %vm192, 0
          %203 = vst.msk [vmem:[#allocation2 + $0x30] sm:$0xf] %vm189, 0
          %204 = vst.msk [vmem:[#allocation2 + $0x34] sm:$0xf] %vm189, 0
          %205 = vst.msk [vmem:[#allocation2 + $0x38] sm:$0x1] %vm192, 0
          %206 = vst.msk [vmem:[#allocation2 + $0x3c] sm:$0xf] %vm189, 0
          %207 = vst.msk [vmem:[#allocation2 + $0x40] sm:$0xf] %vm189, 0
          %208 = vst.msk [vmem:[#allocation2 + $0x44] sm:$0x1] %vm192, 0
          %209 = vst.msk [vmem:[#allocation2 + $0x48] sm:$0xf] %vm189, 0
          %210 = vst.msk [vmem:[#allocation2 + $0x4c] sm:$0xf] %vm189, 0
          %211 = vst.msk [vmem:[#allocation2 + $0x50] sm:$0x1] %vm192, 0
          %212 = vst.msk [vmem:[#allocation2 + $0x54] sm:$0xf] %vm189, 0
          %213 = vst.msk [vmem:[#allocation2 + $0x58] sm:$0xf] %vm189, 0
          %214 = vst.msk [vmem:[#allocation2 + $0x5c] sm:$0x1] %vm192, 0
          %215 = vst.msk [vmem:[#allocation2 + $0x60] sm:$0xf] %vm189, 0
          %216 = vst.msk [vmem:[#allocation2 + $0x64] sm:$0xf] %vm189, 0
          %217 = vst.msk [vmem:[#allocation2 + $0x68] sm:$0x1] %vm192, 0
          %218 = vst.msk [vmem:[#allocation2 + $0x6c] sm:$0xf] %vm189, 0
          %219 = vst.msk [vmem:[#allocation2 + $0x70] sm:$0xf] %vm189, 0
          %220 = vst.msk [vmem:[#allocation2 + $0x74] sm:$0x1] %vm192, 0
          %221 = vst.msk [vmem:[#allocation2 + $0x78] sm:$0xf] %vm189, 0
          %222 = vst.msk [vmem:[#allocation2 + $0x7c] sm:$0xf] %vm189, 0
          %223 = vst.msk [vmem:[#allocation2 + $0x80] sm:$0x1] %vm192, 0
          %224 = vst.msk [vmem:[#allocation2 + $0x84] sm:$0xf] %vm189, 0
          %225 = vst.msk [vmem:[#allocation2 + $0x88] sm:$0xf] %vm189, 0
          %226 = vst.msk [vmem:[#allocation2 + $0x8c] sm:$0x1] %vm192, 0
          %227 = vst.msk [vmem:[#allocation2 + $0x90] sm:$0xf] %vm189, 0
          %228 = vst.msk [vmem:[#allocation2 + $0x94] sm:$0xf] %vm189, 0
          %229 = vst.msk [vmem:[#allocation2 + $0x98] sm:$0x1] %vm192, 0
          %230 = vst.msk [vmem:[#allocation2 + $0x9c] sm:$0xf] %vm189, 0
          %231 = vst.msk [vmem:[#allocation2 + $0xa0] sm:$0xf] %vm189, 0
          %232 = vst.msk [vmem:[#allocation2 + $0xa4] sm:$0x1] %vm192, 0
          %233 = vst.msk [vmem:[#allocation2 + $0xa8] sm:$0xf] %vm189, 0
          %234 = vst.msk [vmem:[#allocation2 + $0xac] sm:$0xf] %vm189, 0
          %235 = vst.msk [vmem:[#allocation2 + $0xb0] sm:$0x1] %vm192, 0
          %236 = vst.msk [vmem:[#allocation2 + $0xb4] sm:$0xf] %vm189, 0
          %237 = vst.msk [vmem:[#allocation2 + $0xb8] sm:$0xf] %vm189, 0
          %238 = vst.msk [vmem:[#allocation2 + $0xbc] sm:$0x1] %vm192, 0
          %239 = vst.msk [vmem:[#allocation2 + $0xc0] sm:$0xf] %vm189, 0
          %240 = vst.msk [vmem:[#allocation2 + $0xc4] sm:$0xf] %vm189, 0
          %241 = vst.msk [vmem:[#allocation2 + $0xc8] sm:$0x1] %vm192, 0
          %242 = vst.msk [vmem:[#allocation2 + $0xcc] sm:$0xf] %vm189, 0
          %243 = vst.msk [vmem:[#allocation2 + $0xd0] sm:$0xf] %vm189, 0
          %244 = vst.msk [vmem:[#allocation2 + $0xd4] sm:$0x1] %vm192, 0
          %v245 = vld [vmem:[%s182] sm:$0xf]
          %v246 = vld [vmem:[%s182 + $0x4] sm:$0xf]
          %v247 = vld [vmem:[%s182 + $0x8] sm:$0xf]
          %v248 = vld [vmem:[%s182 + $0xc] sm:$0xf]
          %v249 = vld [vmem:[%s182 + $0x10] sm:$0xf]
          %v250 = vld [vmem:[%s182 + $0x14] sm:$0xf]
          %v251 = vld [vmem:[%s182 + $0x18] sm:$0xf]
          %v252 = vld [vmem:[%s182 + $0x1c] sm:$0xf]
          %v253 = vld [vmem:[%s182 + $0x20] sm:$0xf]
          %v254 = vld [vmem:[%s182 + $0x24] sm:$0xf]
          %v255 = vld [vmem:[%s182 + $0x28] sm:$0xf]
          %v256 = vld [vmem:[%s182 + $0x2c] sm:$0xf]
          %v257 = vld [vmem:[%s182 + $0x30] sm:$0xf]
          %v258 = vld [vmem:[%s182 + $0x34] sm:$0xf]
          %v259 = vld [vmem:[%s182 + $0x38] sm:$0xf]
          %v260 = vld [vmem:[%s182 + $0x3c] sm:$0xf]
          %v261 = vld [vmem:[%s182 + $0x40] sm:$0xf]
          %v262 = vld [vmem:[%s182 + $0x44] sm:$0xf]
          %v263 = vld [vmem:[%s182 + $0x48] sm:$0xf]
          %v264 = vld [vmem:[%s182 + $0x4c] sm:$0xf]
          %v265 = vld [vmem:[%s182 + $0x50] sm:$0xf]
          %v266 = vld [vmem:[%s182 + $0x54] sm:$0xf]
          %v267 = vld [vmem:[%s182 + $0x58] sm:$0xf]
          %v268 = vld [vmem:[%s182 + $0x5c] sm:$0xf]
          %v269 = vld [vmem:[%s182 + $0x60] sm:$0xf]
          %v270 = vld [vmem:[%s182 + $0x64] sm:$0xf]
          %v271 = vld [vmem:[%s182 + $0x68] sm:$0xf]
          %v272 = vld [vmem:[%s182 + $0x6c] sm:$0xf]
          %v273 = vld [vmem:[%s182 + $0x70] sm:$0xf]
          %v274 = vld [vmem:[%s182 + $0x74] sm:$0xf]
          %v275 = vld [vmem:[%s182 + $0x78] sm:$0xf]
          %v276 = vld [vmem:[%s182 + $0x7c] sm:$0xf]
          %vm277 = vsmask.f32 256
          %vm278 = vsmask.f32 4368
          %vm279 = vmor %vm277, %vm278
          %v281 = vshrl.u32 %v245, 16
          %v283 = vrot.slane %v281, 7
          %v284 = vshll.u32 %v245, 16
          %v286 = vor.u32 %v283, %v284
          %v287 = vrot.slane %v283, 4
          %v289 = vshrl.u32 %v246, 16
          %v291 = vrot.slane %v289, 7
          %v292 = vshll.u32 %v246, 16
          %v294 = vor.u32 %v291, %v292
          %v295 = vsel %vm279, %v287, %v294
          %v296 = vrot.slane %v291, 4
          %v298 = vshrl.u32 %v247, 16
          %v300 = vrot.slane %v298, 7
          %v301 = vshll.u32 %v247, 16
          %v303 = vor.u32 %v300, %v301
          %v304 = vrot.slane %v300, 4
          %v306 = vshrl.u32 %v248, 16
          %v308 = vrot.slane %v306, 7
          %v309 = vshll.u32 %v248, 16
          %v311 = vor.u32 %v308, %v309
          %v312 = vsel %vm279, %v304, %v311
          %v313 = vrot.slane %v308, 4
          %v315 = vshrl.u32 %v249, 16
          %v317 = vrot.slane %v315, 7
          %v318 = vshll.u32 %v249, 16
          %v320 = vor.u32 %v317, %v318
          %v321 = vrot.slane %v317, 4
          %v323 = vshrl.u32 %v250, 16
          %v325 = vrot.slane %v323, 7
          %v326 = vshll.u32 %v250, 16
          %v328 = vor.u32 %v325, %v326
          %v329 = vsel %vm279, %v321, %v328
          %v330 = vrot.slane %v325, 4
          %v332 = vshrl.u32 %v251, 16
          %v334 = vrot.slane %v332, 7
          %v335 = vshll.u32 %v251, 16
          %v337 = vor.u32 %v334, %v335
          %v338 = vrot.slane %v334, 4
          %v340 = vshrl.u32 %v252, 16
          %v342 = vrot.slane %v340, 7
          %v343 = vshll.u32 %v252, 16
          %v345 = vor.u32 %v342, %v343
          %v346 = vsel %vm279, %v338, %v345
          %v347 = vrot.slane %v342, 4
          %v349 = vshrl.u32 %v253, 16
          %v351 = vrot.slane %v349, 7
          %v352 = vshll.u32 %v253, 16
          %v354 = vor.u32 %v351, %v352
          %v355 = vrot.slane %v351, 4
          %v357 = vshrl.u32 %v254, 16
          %v359 = vrot.slane %v357, 7
          %v360 = vshll.u32 %v254, 16
          %v362 = vor.u32 %v359, %v360
          %v363 = vsel %vm279, %v355, %v362
          %v364 = vrot.slane %v359, 4
          %v366 = vshrl.u32 %v255, 16
          %v368 = vrot.slane %v366, 7
          %v369 = vshll.u32 %v255, 16
          %v371 = vor.u32 %v368, %v369
          %v372 = vrot.slane %v368, 4
          %v374 = vshrl.u32 %v256, 16
          %v376 = vrot.slane %v374, 7
          %v377 = vshll.u32 %v256, 16
          %v379 = vor.u32 %v376, %v377
          %v380 = vsel %vm279, %v372, %v379
          %v381 = vrot.slane %v376, 4
          %v383 = vshrl.u32 %v257, 16
          %v385 = vrot.slane %v383, 7
          %v386 = vshll.u32 %v257, 16
          %v388 = vor.u32 %v385, %v386
          %v389 = vrot.slane %v385, 4
          %v391 = vshrl.u32 %v258, 16
          %v393 = vrot.slane %v391, 7
          %v394 = vshll.u32 %v258, 16
          %v396 = vor.u32 %v393, %v394
          %v397 = vsel %vm279, %v389, %v396
          %v398 = vrot.slane %v393, 4
          %v400 = vshrl.u32 %v259, 16
          %v402 = vrot.slane %v400, 7
          %v403 = vshll.u32 %v259, 16
          %v405 = vor.u32 %v402, %v403
          %v406 = vrot.slane %v402, 4
          %v408 = vshrl.u32 %v260, 16
          %v410 = vrot.slane %v408, 7
          %v411 = vshll.u32 %v260, 16
          %v413 = vor.u32 %v410, %v411
          %v414 = vsel %vm279, %v406, %v413
          %v415 = vrot.slane %v410, 4
          %v417 = vshrl.u32 %v261, 16
          %v419 = vrot.slane %v417, 7
          %v420 = vshll.u32 %v261, 16
          %v422 = vor.u32 %v419, %v420
          %v423 = vrot.slane %v419, 4
          %v425 = vshrl.u32 %v262, 16
          %v427 = vrot.slane %v425, 7
          %v428 = vshll.u32 %v262, 16
          %v430 = vor.u32 %v427, %v428
          %v431 = vsel %vm279, %v423, %v430
          %v432 = vrot.slane %v427, 4
          %v434 = vshrl.u32 %v263, 16
          %v436 = vrot.slane %v434, 7
          %v437 = vshll.u32 %v263, 16
          %v439 = vor.u32 %v436, %v437
          %v440 = vrot.slane %v436, 4
          %v442 = vshrl.u32 %v264, 16
          %v444 = vrot.slane %v442, 7
          %v445 = vshll.u32 %v264, 16
          %v447 = vor.u32 %v444, %v445
          %v448 = vsel %vm279, %v440, %v447
          %v449 = vrot.slane %v444, 4
          %v451 = vshrl.u32 %v265, 16
          %v453 = vrot.slane %v451, 7
          %v454 = vshll.u32 %v265, 16
          %v456 = vor.u32 %v453, %v454
          %v457 = vrot.slane %v453, 4
          %v459 = vshrl.u32 %v266, 16
          %v461 = vrot.slane %v459, 7
          %v462 = vshll.u32 %v266, 16
          %v464 = vor.u32 %v461, %v462
          %v465 = vsel %vm279, %v457, %v464
          %v466 = vrot.slane %v461, 4
          %v468 = vshrl.u32 %v267, 16
          %v470 = vrot.slane %v468, 7
          %v471 = vshll.u32 %v267, 16
          %v473 = vor.u32 %v470, %v471
          %v474 = vrot.slane %v470, 4
          %v476 = vshrl.u32 %v268, 16
          %v478 = vrot.slane %v476, 7
          %v479 = vshll.u32 %v268, 16
          %v481 = vor.u32 %v478, %v479
          %v482 = vsel %vm279, %v474, %v481
          %v483 = vrot.slane %v478, 4
          %v485 = vshrl.u32 %v269, 16
          %v487 = vrot.slane %v485, 7
          %v488 = vshll.u32 %v269, 16
          %v490 = vor.u32 %v487, %v488
          %v491 = vrot.slane %v487, 4
          %v493 = vshrl.u32 %v270, 16
          %v495 = vrot.slane %v493, 7
          %v496 = vshll.u32 %v270, 16
          %v498 = vor.u32 %v495, %v496
          %v499 = vsel %vm279, %v491, %v498
          %v500 = vrot.slane %v495, 4
          %v502 = vshrl.u32 %v271, 16
          %v504 = vrot.slane %v502, 7
          %v505 = vshll.u32 %v271, 16
          %v507 = vor.u32 %v504, %v505
          %v508 = vrot.slane %v504, 4
          %v510 = vshrl.u32 %v272, 16
          %v512 = vrot.slane %v510, 7
          %v513 = vshll.u32 %v272, 16
          %v515 = vor.u32 %v512, %v513
          %v516 = vsel %vm279, %v508, %v515
          %v517 = vrot.slane %v512, 4
          %v519 = vshrl.u32 %v273, 16
          %v521 = vrot.slane %v519, 7
          %v522 = vshll.u32 %v273, 16
          %v524 = vor.u32 %v521, %v522
          %v525 = vrot.slane %v521, 4
          %v527 = vshrl.u32 %v274, 16
          %v529 = vrot.slane %v527, 7
          %v530 = vshll.u32 %v274, 16
          %v532 = vor.u32 %v529, %v530
          %v533 = vsel %vm279, %v525, %v532
          %v534 = vrot.slane %v529, 4
          %v536 = vshrl.u32 %v275, 16
          %v538 = vrot.slane %v536, 7
          %v539 = vshll.u32 %v275, 16
          %v541 = vor.u32 %v538, %v539
          %v542 = vrot.slane %v538, 4
          %v544 = vshrl.u32 %v276, 16
          %v546 = vrot.slane %v544, 7
          %v547 = vshll.u32 %v276, 16
          %v549 = vor.u32 %v546, %v547
          %v550 = vsel %vm279, %v542, %v549
          %v551 = vrot.slane %v546, 4
          %s600 = scalar_lea.vmem [#allocation2], 12
          %vm601 = vcmask 257024
          %vm602 = vsmask.f32 7938
          %vm603 = vmand %vm601, %vm602
          %v604 = vld [vmem:[%s600] sm:$0xf]
          %v605 = vsel %vm603, %v286, %v604
          %606 = vst [vmem:[%s600] sm:$0xf] %v605
          %607 = vst.msk [vmem:[%s600 + $0x4] sm:$0xf] %vm189, %v295
          %vm608 = vcmask 253952
          %vm609 = vmand %vm608, %vm277
          %v610 = vld [vmem:[%s600 + $0x8] sm:$0x1]
          %v611 = vsel %vm609, %v296, %v610
          %612 = vst [vmem:[%s600 + $0x8] sm:$0x1] %v611
          %v613 = vld [vmem:[%s600 + $0xc] sm:$0xf]
          %v614 = vsel %vm603, %v303, %v613
          %615 = vst [vmem:[%s600 + $0xc] sm:$0xf] %v614
          %616 = vst.msk [vmem:[%s600 + $0x10] sm:$0xf] %vm189, %v312
          %v617 = vld [vmem:[%s600 + $0x14] sm:$0x1]
          %v618 = vsel %vm609, %v313, %v617
          %619 = vst [vmem:[%s600 + $0x14] sm:$0x1] %v618
          %v620 = vld [vmem:[%s600 + $0x18] sm:$0xf]
          %v621 = vsel %vm603, %v320, %v620
          %622 = vst [vmem:[%s600 + $0x18] sm:$0xf] %v621
          %623 = vst.msk [vmem:[%s600 + $0x1c] sm:$0xf] %vm189, %v329
          %v624 = vld [vmem:[%s600 + $0x20] sm:$0x1]
          %v625 = vsel %vm609, %v330, %v624
          %626 = vst [vmem:[%s600 + $0x20] sm:$0x1] %v625
          %v627 = vld [vmem:[%s600 + $0x24] sm:$0xf]
          %v628 = vsel %vm603, %v337, %v627
          %629 = vst [vmem:[%s600 + $0x24] sm:$0xf] %v628
          %630 = vst.msk [vmem:[%s600 + $0x28] sm:$0xf] %vm189, %v346
          %v631 = vld [vmem:[%s600 + $0x2c] sm:$0x1]
          %v632 = vsel %vm609, %v347, %v631
          %633 = vst [vmem:[%s600 + $0x2c] sm:$0x1] %v632
          %v634 = vld [vmem:[%s600 + $0x30] sm:$0xf]
          %v635 = vsel %vm603, %v354, %v634
          %636 = vst [vmem:[%s600 + $0x30] sm:$0xf] %v635
          %637 = vst.msk [vmem:[%s600 + $0x34] sm:$0xf] %vm189, %v363
          %v638 = vld [vmem:[%s600 + $0x38] sm:$0x1]
          %v639 = vsel %vm609, %v364, %v638
          %640 = vst [vmem:[%s600 + $0x38] sm:$0x1] %v639
          %v641 = vld [vmem:[%s600 + $0x3c] sm:$0xf]
          %v642 = vsel %vm603, %v371, %v641
          %643 = vst [vmem:[%s600 + $0x3c] sm:$0xf] %v642
          %644 = vst.msk [vmem:[%s600 + $0x40] sm:$0xf] %vm189, %v380
          %v645 = vld [vmem:[%s600 + $0x44] sm:$0x1]
          %v646 = vsel %vm609, %v381, %v645
          %647 = vst [vmem:[%s600 + $0x44] sm:$0x1] %v646
          %v648 = vld [vmem:[%s600 + $0x48] sm:$0xf]
          %v649 = vsel %vm603, %v388, %v648
          %650 = vst [vmem:[%s600 + $0x48] sm:$0xf] %v649
          %651 = vst.msk [vmem:[%s600 + $0x4c] sm:$0xf] %vm189, %v397
          %v652 = vld [vmem:[%s600 + $0x50] sm:$0x1]
          %v653 = vsel %vm609, %v398, %v652
          %654 = vst [vmem:[%s600 + $0x50] sm:$0x1] %v653
          %v655 = vld [vmem:[%s600 + $0x54] sm:$0xf]
          %v656 = vsel %vm603, %v405, %v655
          %657 = vst [vmem:[%s600 + $0x54] sm:$0xf] %v656
          %658 = vst.msk [vmem:[%s600 + $0x58] sm:$0xf] %vm189, %v414
          %v659 = vld [vmem:[%s600 + $0x5c] sm:$0x1]
          %v660 = vsel %vm609, %v415, %v659
          %661 = vst [vmem:[%s600 + $0x5c] sm:$0x1] %v660
          %v662 = vld [vmem:[%s600 + $0x60] sm:$0xf]
          %v663 = vsel %vm603, %v422, %v662
          %664 = vst [vmem:[%s600 + $0x60] sm:$0xf] %v663
          %665 = vst.msk [vmem:[%s600 + $0x64] sm:$0xf] %vm189, %v431
          %v666 = vld [vmem:[%s600 + $0x68] sm:$0x1]
          %v667 = vsel %vm609, %v432, %v666
          %668 = vst [vmem:[%s600 + $0x68] sm:$0x1] %v667
          %v669 = vld [vmem:[%s600 + $0x6c] sm:$0xf]
          %v670 = vsel %vm603, %v439, %v669
          %671 = vst [vmem:[%s600 + $0x6c] sm:$0xf] %v670
          %672 = vst.msk [vmem:[%s600 + $0x70] sm:$0xf] %vm189, %v448
          %v673 = vld [vmem:[%s600 + $0x74] sm:$0x1]
          %v674 = vsel %vm609, %v449, %v673
          %675 = vst [vmem:[%s600 + $0x74] sm:$0x1] %v674
          %v676 = vld [vmem:[%s600 + $0x78] sm:$0xf]
          %v677 = vsel %vm603, %v456, %v676
          %678 = vst [vmem:[%s600 + $0x78] sm:$0xf] %v677
          %679 = vst.msk [vmem:[%s600 + $0x7c] sm:$0xf] %vm189, %v465
          %v680 = vld [vmem:[%s600 + $0x80] sm:$0x1]
          %v681 = vsel %vm609, %v466, %v680
          %682 = vst [vmem:[%s600 + $0x80] sm:$0x1] %v681
          %v683 = vld [vmem:[%s600 + $0x84] sm:$0xf]
          %v684 = vsel %vm603, %v473, %v683
          %685 = vst [vmem:[%s600 + $0x84] sm:$0xf] %v684
          %686 = vst.msk [vmem:[%s600 + $0x88] sm:$0xf] %vm189, %v482
          %v687 = vld [vmem:[%s600 + $0x8c] sm:$0x1]
          %v688 = vsel %vm609, %v483, %v687
          %689 = vst [vmem:[%s600 + $0x8c] sm:$0x1] %v688
          %v690 = vld [vmem:[%s600 + $0x90] sm:$0xf]
          %v691 = vsel %vm603, %v490, %v690
          %692 = vst [vmem:[%s600 + $0x90] sm:$0xf] %v691
          %693 = vst.msk [vmem:[%s600 + $0x94] sm:$0xf] %vm189, %v499
          %v694 = vld [vmem:[%s600 + $0x98] sm:$0x1]
          %v695 = vsel %vm609, %v500, %v694
          %696 = vst [vmem:[%s600 + $0x98] sm:$0x1] %v695
          %v697 = vld [vmem:[%s600 + $0x9c] sm:$0xf]
          %v698 = vsel %vm603, %v507, %v697
          %699 = vst [vmem:[%s600 + $0x9c] sm:$0xf] %v698
          %700 = vst.msk [vmem:[%s600 + $0xa0] sm:$0xf] %vm189, %v516
          %v701 = vld [vmem:[%s600 + $0xa4] sm:$0x1]
          %v702 = vsel %vm609, %v517, %v701
          %703 = vst [vmem:[%s600 + $0xa4] sm:$0x1] %v702
          %v704 = vld [vmem:[%s600 + $0xa8] sm:$0xf]
          %v705 = vsel %vm603, %v524, %v704
          %706 = vst [vmem:[%s600 + $0xa8] sm:$0xf] %v705
          %707 = vst.msk [vmem:[%s600 + $0xac] sm:$0xf] %vm189, %v533
          %v708 = vld [vmem:[%s600 + $0xb0] sm:$0x1]
          %v709 = vsel %vm609, %v534, %v708
          %710 = vst [vmem:[%s600 + $0xb0] sm:$0x1] %v709
          %v711 = vld [vmem:[%s600 + $0xb4] sm:$0xf]
          %v712 = vsel %vm603, %v541, %v711
          %713 = vst [vmem:[%s600 + $0xb4] sm:$0xf] %v712
          %714 = vst.msk [vmem:[%s600 + $0xb8] sm:$0xf] %vm189, %v550
          %v715 = vld [vmem:[%s600 + $0xbc] sm:$0x1]
          %v716 = vsel %vm609, %v551, %v715
          %717 = vst [vmem:[%s600 + $0xbc] sm:$0x1] %v716
        $region36: #{basic_conv2d_forward.1} parent=31 // pred_fallthru
          _
        %s718 = smul.u32 %s22, 8
        %s719 = smul.u32 %s718, 3
        %s720 = smul.addr %s719, 4
        %s721 = scalar_lea.vmem [#allocation2], %s720
        %v722 = vld [vmem:[%s721] sm:$0xf]
        %v723 = vld [vmem:[%s721 + $0x4] sm:$0xf]
        %v724 = vld [vmem:[%s721 + $0xc] sm:$0xf]
        %v725 = vld [vmem:[%s721 + $0x10] sm:$0xf]
        %v726 = vld [vmem:[%s721 + $0x18] sm:$0xf]
        %v727 = vld [vmem:[%s721 + $0x1c] sm:$0xf]
        %v728 = vld [vmem:[%s721 + $0x24] sm:$0xf]
        %v729 = vld [vmem:[%s721 + $0x28] sm:$0xf]
        %v730 = vld [vmem:[%s721 + $0x30] sm:$0xf]
        %v731 = vld [vmem:[%s721 + $0x34] sm:$0xf]
        %v732 = vld [vmem:[%s721 + $0x3c] sm:$0xf]
        %v733 = vld [vmem:[%s721 + $0x40] sm:$0xf]
        %v734 = vld [vmem:[%s721 + $0x48] sm:$0xf]
        %v735 = vld [vmem:[%s721 + $0x4c] sm:$0xf]
        %v736 = vld [vmem:[%s721 + $0x54] sm:$0xf]
        %v737 = vld [vmem:[%s721 + $0x58] sm:$0xf]
        %v738 = vld [vmem:[%s1] sm:$0xf]
        %v739 = vld [vmem:[%s1 + $0x4] sm:$0xf]
        %v740 = vld [vmem:[%s1 + $0x8] sm:$0xf]
        %v741 = vld [vmem:[%s1 + $0xc] sm:$0xf]
        %v742 = vld [vmem:[%s721 + $0x8] sm:$0x1]
        %v743 = vld [vmem:[%s721 + $0x14] sm:$0x1]
        %v744 = vld [vmem:[%s721 + $0x20] sm:$0x1]
        %v745 = vld [vmem:[%s721 + $0x2c] sm:$0x1]
        %v746 = vld [vmem:[%s721 + $0x38] sm:$0x1]
        %v747 = vld [vmem:[%s721 + $0x44] sm:$0x1]
        %v748 = vld [vmem:[%s721 + $0x50] sm:$0x1]
        %v749 = vld [vmem:[%s721 + $0x5c] sm:$0x1]
        %vm750 = vsmask.f32 3328
        %vm751 = vsmask.f32 7440
        %vm752 = vmor %vm750, %vm751
        %v754 = vshrl.u32 %v722, 16
        %v756 = vrot.slane %v754, 4
        %v757 = vshll.u32 %v722, 16
        %v759 = vrot.slane %v757, 5
        %v760 = vor.u32 %v756, %v759
        %v761 = vrot.slane %v760, 4
        %v763 = vshll.u32 %v723, 16
        %v765 = vrot.slane %v763, 5
        %v766 = vsel %vm752, %v761, %v765
        %v767 = vshrl.u32 %v723, 16
        %v769 = vrot.slane %v767, 4
        %v770 = vor.u32 %v769, %v765
        %v771 = vrot.slane %v770, 4
        %v773 = vshll.u32 %v742, 16
        %v775 = vrot.slane %v773, 5
        %v776 = vsel %vm752, %v771, %v775
        %v778 = vshrl.u32 %v724, 16
        %v780 = vrot.slane %v778, 4
        %v781 = vshll.u32 %v724, 16
        %v783 = vrot.slane %v781, 5
        %v784 = vor.u32 %v780, %v783
        %v785 = vrot.slane %v784, 4
        %v787 = vshll.u32 %v725, 16
        %v789 = vrot.slane %v787, 5
        %v790 = vsel %vm752, %v785, %v789
        %v791 = vshrl.u32 %v725, 16
        %v793 = vrot.slane %v791, 4
        %v794 = vor.u32 %v793, %v789
        %v795 = vrot.slane %v794, 4
        %v797 = vshll.u32 %v743, 16
        %v799 = vrot.slane %v797, 5
        %v800 = vsel %vm752, %v795, %v799
        %v802 = vshrl.u32 %v726, 16
        %v804 = vrot.slane %v802, 4
        %v805 = vshll.u32 %v726, 16
        %v807 = vrot.slane %v805, 5
        %v808 = vor.u32 %v804, %v807
        %v809 = vrot.slane %v808, 4
        %v811 = vshll.u32 %v727, 16
        %v813 = vrot.slane %v811, 5
        %v814 = vsel %vm752, %v809, %v813
        %v815 = vshrl.u32 %v727, 16
        %v817 = vrot.slane %v815, 4
        %v818 = vor.u32 %v817, %v813
        %v819 = vrot.slane %v818, 4
        %v821 = vshll.u32 %v744, 16
        %v823 = vrot.slane %v821, 5
        %v824 = vsel %vm752, %v819, %v823
        %v826 = vshrl.u32 %v728, 16
        %v828 = vrot.slane %v826, 4
        %v829 = vshll.u32 %v728, 16
        %v831 = vrot.slane %v829, 5
        %v832 = vor.u32 %v828, %v831
        %v833 = vrot.slane %v832, 4
        %v835 = vshll.u32 %v729, 16
        %v837 = vrot.slane %v835, 5
        %v838 = vsel %vm752, %v833, %v837
        %v839 = vshrl.u32 %v729, 16
        %v841 = vrot.slane %v839, 4
        %v842 = vor.u32 %v841, %v837
        %v843 = vrot.slane %v842, 4
        %v845 = vshll.u32 %v745, 16
        %v847 = vrot.slane %v845, 5
        %v848 = vsel %vm752, %v843, %v847
        %v850 = vshrl.u32 %v730, 16
        %v852 = vrot.slane %v850, 4
        %v853 = vshll.u32 %v730, 16
        %v855 = vrot.slane %v853, 5
        %v856 = vor.u32 %v852, %v855
        %v857 = vrot.slane %v856, 4
        %v859 = vshll.u32 %v731, 16
        %v861 = vrot.slane %v859, 5
        %v862 = vsel %vm752, %v857, %v861
        %v863 = vshrl.u32 %v731, 16
        %v865 = vrot.slane %v863, 4
        %v866 = vor.u32 %v865, %v861
        %v867 = vrot.slane %v866, 4
        %v869 = vshll.u32 %v746, 16
        %v871 = vrot.slane %v869, 5
        %v872 = vsel %vm752, %v867, %v871
        %v874 = vshrl.u32 %v732, 16
        %v876 = vrot.slane %v874, 4
        %v877 = vshll.u32 %v732, 16
        %v879 = vrot.slane %v877, 5
        %v880 = vor.u32 %v876, %v879
        %v881 = vrot.slane %v880, 4
        %v883 = vshll.u32 %v733, 16
        %v885 = vrot.slane %v883, 5
        %v886 = vsel %vm752, %v881, %v885
        %v887 = vshrl.u32 %v733, 16
        %v889 = vrot.slane %v887, 4
        %v890 = vor.u32 %v889, %v885
        %v891 = vrot.slane %v890, 4
        %v893 = vshll.u32 %v747, 16
        %v895 = vrot.slane %v893, 5
        %v896 = vsel %vm752, %v891, %v895
        %v898 = vshrl.u32 %v734, 16
        %v900 = vrot.slane %v898, 4
        %v901 = vshll.u32 %v734, 16
        %v903 = vrot.slane %v901, 5
        %v904 = vor.u32 %v900, %v903
        %v905 = vrot.slane %v904, 4
        %v907 = vshll.u32 %v735, 16
        %v909 = vrot.slane %v907, 5
        %v910 = vsel %vm752, %v905, %v909
        %v911 = vshrl.u32 %v735, 16
        %v913 = vrot.slane %v911, 4
        %v914 = vor.u32 %v913, %v909
        %v915 = vrot.slane %v914, 4
        %v917 = vshll.u32 %v748, 16
        %v919 = vrot.slane %v917, 5
        %v920 = vsel %vm752, %v915, %v919
        %v922 = vshrl.u32 %v736, 16
        %v924 = vrot.slane %v922, 4
        %v925 = vshll.u32 %v736, 16
        %v927 = vrot.slane %v925, 5
        %v928 = vor.u32 %v924, %v927
        %v929 = vrot.slane %v928, 4
        %v931 = vshll.u32 %v737, 16
        %v933 = vrot.slane %v931, 5
        %v934 = vsel %vm752, %v929, %v933
        %v935 = vshrl.u32 %v737, 16
        %v937 = vrot.slane %v935, 4
        %v938 = vor.u32 %v937, %v933
        %v939 = vrot.slane %v938, 4
        %v941 = vshll.u32 %v749, 16
        %v943 = vrot.slane %v941, 5
        %v944 = vsel %vm752, %v939, %v943
        %v945 = vld [vmem:[%s1 + $0x10] sm:$0xf]
        %v946 = vld [vmem:[%s1 + $0x14] sm:$0xf]
        %v947 = vld [vmem:[%s1 + $0x18] sm:$0xf]
        %v948 = vld [vmem:[%s1 + $0x1c] sm:$0xf]
        %v949 = vunpack.c.l.b16 %v766
        %v950 = vunpack.c.l.b16 %v776
        %v951 = vunpack.c.l.b16 %v790
        %v952 = vunpack.c.l.b16 %v800
        %v953 = vunpack.c.l.b16 %v814
        %v954 = vunpack.c.l.b16 %v824
        %v955 = vunpack.c.l.b16 %v838
        %v956 = vunpack.c.l.b16 %v848
        %v957 = vunpack.c.l.b16 %v862
        %v958 = vunpack.c.l.b16 %v872
        %v959 = vunpack.c.l.b16 %v886
        %v960 = vunpack.c.l.b16 %v896
        %v961 = vunpack.c.l.b16 %v910
        %v962 = vunpack.c.l.b16 %v920
        %v963 = vunpack.c.l.b16 %v934
        %v964 = vunpack.c.l.b16 %v944
        %v965 = vpack.c.b16 %v950, %v949
        %v966 = vpack.c.b16 %v952, %v951
        %v967 = vpack.c.b16 %v954, %v953
        %v968 = vpack.c.b16 %v956, %v955
        %v969 = vpack.c.b16 %v958, %v957
        %v970 = vpack.c.b16 %v960, %v959
        %v971 = vpack.c.b16 %v962, %v961
        %v972 = vpack.c.b16 %v964, %v963
        %v977 = vunpack.c.l.b16 %v945
        %v978 = vunpack.c.l.b16 %v946
        %v979 = vunpack.c.l.b16 %v947
        %v980 = vunpack.c.l.b16 %v948
        %v981 = vpack.c.b16 %v978, %v977
        %v982 = vpack.c.b16 %v980, %v979
        %vm985 = vcmask 261120
        %v987 = vsel %vm985, %v965, 0
        %v990 = vsel %vm985, %v966, 0
        %v993 = vsel %vm985, %v967, 0
        %v996 = vsel %vm985, %v968, 0
        %v999 = vsel %vm985, %v969, 0
        %v1002 = vsel %vm985, %v970, 0
        %v1005 = vsel %vm985, %v971, 0
        %v1008 = vsel %vm985, %v972, 0
        %1010 = vmatpush.bf16.msra.mxu0 0
        %1011 = vmatpush.bf16.msra.mxu0 0
        %1012 = vmatpush.bf16.msra.mxu0 0
        %1013 = vmatpush.bf16.msra.mxu0 0
        %1014 = vmatpush.bf16.msra.mxu0 0
        %1015 = vmatpush.bf16.msra.mxu0 0
        %1016 = vmatpush.bf16.msra.mxu0 %v982
        %1017 = vmatpush.bf16.msra.mxu0 %v981
        %1018 = vmatmul.bf16.gmra.mxu0 %v987
        %v1019 = vpop.f32.mrf.mxu0
        %v1020 = vadd.f32 0.0, %v1019
        %v1021 = vpop.f32.mrf.mxu0
        %v1022 = vadd.f32 0.0, %v1021
        %1023 = vmatmul.bf16.gmra.mxu0 %v990
        %v1024 = vpop.f32.mrf.mxu0
        %v1025 = vadd.f32 0.0, %v1024
        %v1026 = vpop.f32.mrf.mxu0
        %v1027 = vadd.f32 0.0, %v1026
        %1028 = vmatmul.bf16.gmra.mxu0 %v993
        %v1029 = vpop.f32.mrf.mxu0
        %v1030 = vadd.f32 0.0, %v1029
        %v1031 = vpop.f32.mrf.mxu0
        %v1032 = vadd.f32 0.0, %v1031
        %1033 = vmatmul.bf16.gmra.mxu0 %v996
        %v1034 = vpop.f32.mrf.mxu0
        %v1035 = vadd.f32 0.0, %v1034
        %v1036 = vpop.f32.mrf.mxu0
        %v1037 = vadd.f32 0.0, %v1036
        %1038 = vmatmul.bf16.gmra.mxu0 %v999
        %v1039 = vpop.f32.mrf.mxu0
        %v1040 = vadd.f32 0.0, %v1039
        %v1041 = vpop.f32.mrf.mxu0
        %v1042 = vadd.f32 0.0, %v1041
        %1043 = vmatmul.bf16.gmra.mxu0 %v1002
        %v1044 = vpop.f32.mrf.mxu0
        %v1045 = vadd.f32 0.0, %v1044
        %v1046 = vpop.f32.mrf.mxu0
        %v1047 = vadd.f32 0.0, %v1046
        %1048 = vmatmul.bf16.gmra.mxu0 %v1005
        %v1049 = vpop.f32.mrf.mxu0
        %v1050 = vadd.f32 0.0, %v1049
        %v1051 = vpop.f32.mrf.mxu0
        %v1052 = vadd.f32 0.0, %v1051
        %1053 = vmatmul.bf16.gmra.mxu0 %v1008
        %v1054 = vpop.f32.mrf.mxu0
        %v1055 = vadd.f32 0.0, %v1054
        %v1056 = vpop.f32.mrf.mxu0
        %v1057 = vadd.f32 0.0, %v1056
        %1058 = vdwg.mxu0
        %v1075 = vunpack.c.l.b16 %v722
        %v1076 = vunpack.c.l.b16 %v723
        %v1077 = vunpack.c.l.b16 %v724
        %v1078 = vunpack.c.l.b16 %v725
        %v1079 = vunpack.c.l.b16 %v726
        %v1080 = vunpack.c.l.b16 %v727
        %v1081 = vunpack.c.l.b16 %v728
        %v1082 = vunpack.c.l.b16 %v729
        %v1083 = vunpack.c.l.b16 %v730
        %v1084 = vunpack.c.l.b16 %v731
        %v1085 = vunpack.c.l.b16 %v732
        %v1086 = vunpack.c.l.b16 %v733
        %v1087 = vunpack.c.l.b16 %v734
        %v1088 = vunpack.c.l.b16 %v735
        %v1089 = vunpack.c.l.b16 %v736
        %v1090 = vunpack.c.l.b16 %v737
        %v1091 = vpack.c.b16 %v1076, %v1075
        %v1092 = vpack.c.b16 %v1078, %v1077
        %v1093 = vpack.c.b16 %v1080, %v1079
        %v1094 = vpack.c.b16 %v1082, %v1081
        %v1095 = vpack.c.b16 %v1084, %v1083
        %v1096 = vpack.c.b16 %v1086, %v1085
        %v1097 = vpack.c.b16 %v1088, %v1087
        %v1098 = vpack.c.b16 %v1090, %v1089
        %v1103 = vunpack.c.l.b16 %v738
        %v1104 = vunpack.c.l.b16 %v739
        %v1105 = vunpack.c.l.b16 %v740
        %v1106 = vunpack.c.l.b16 %v741
        %v1107 = vpack.c.b16 %v1104, %v1103
        %v1108 = vpack.c.b16 %v1106, %v1105
        %v1112 = vsel %vm985, %v1091, 0
        %v1115 = vsel %vm985, %v1092, 0
        %v1118 = vsel %vm985, %v1093, 0
        %v1121 = vsel %vm985, %v1094, 0
        %v1124 = vsel %vm985, %v1095, 0
        %v1127 = vsel %vm985, %v1096, 0
        %v1130 = vsel %vm985, %v1097, 0
        %v1133 = vsel %vm985, %v1098, 0
        %1135 = vmatpush.bf16.msra.mxu0 0
        %1136 = vmatpush.bf16.msra.mxu0 0
        %1137 = vmatpush.bf16.msra.mxu0 0
        %1138 = vmatpush.bf16.msra.mxu0 0
        %1139 = vmatpush.bf16.msra.mxu0 0
        %1140 = vmatpush.bf16.msra.mxu0 0
        %1141 = vmatpush.bf16.msra.mxu0 %v1108
        %1142 = vmatpush.bf16.msra.mxu0 %v1107
        %1143 = vmatmul.bf16.gmra.mxu0 %v1112
        %v1144 = vpop.f32.mrf.mxu0
        %v1145 = vadd.f32 %v1020, %v1144
        %v1146 = vpop.f32.mrf.mxu0
        %v1147 = vadd.f32 %v1022, %v1146
        %1148 = vmatmul.bf16.gmra.mxu0 %v1115
        %v1149 = vpop.f32.mrf.mxu0
        %v1150 = vadd.f32 %v1025, %v1149
        %v1151 = vpop.f32.mrf.mxu0
        %v1152 = vadd.f32 %v1027, %v1151
        %1153 = vmatmul.bf16.gmra.mxu0 %v1118
        %v1154 = vpop.f32.mrf.mxu0
        %v1155 = vadd.f32 %v1030, %v1154
        %v1156 = vpop.f32.mrf.mxu0
        %v1157 = vadd.f32 %v1032, %v1156
        %1158 = vmatmul.bf16.gmra.mxu0 %v1121
        %v1159 = vpop.f32.mrf.mxu0
        %v1160 = vadd.f32 %v1035, %v1159
        %v1161 = vpop.f32.mrf.mxu0
        %v1162 = vadd.f32 %v1037, %v1161
        %1163 = vmatmul.bf16.gmra.mxu0 %v1124
        %v1164 = vpop.f32.mrf.mxu0
        %v1165 = vadd.f32 %v1040, %v1164
        %v1166 = vpop.f32.mrf.mxu0
        %v1167 = vadd.f32 %v1042, %v1166
        %1168 = vmatmul.bf16.gmra.mxu0 %v1127
        %v1169 = vpop.f32.mrf.mxu0
        %v1170 = vadd.f32 %v1045, %v1169
        %v1171 = vpop.f32.mrf.mxu0
        %v1172 = vadd.f32 %v1047, %v1171
        %1173 = vmatmul.bf16.gmra.mxu0 %v1130
        %v1174 = vpop.f32.mrf.mxu0
        %v1175 = vadd.f32 %v1050, %v1174
        %v1176 = vpop.f32.mrf.mxu0
        %v1177 = vadd.f32 %v1052, %v1176
        %1178 = vmatmul.bf16.gmra.mxu0 %v1133
        %v1179 = vpop.f32.mrf.mxu0
        %v1180 = vadd.f32 %v1055, %v1179
        %v1181 = vpop.f32.mrf.mxu0
        %v1182 = vadd.f32 %v1057, %v1181
        %1183 = vdwg.mxu0
        %v1184 = vld [vmem:[%s721] sm:$0xe]
        %v1185 = vld [vmem:[%s721 + $0xc] sm:$0xe]
        %v1186 = vld [vmem:[%s721 + $0x18] sm:$0xe]
        %v1187 = vld [vmem:[%s721 + $0x24] sm:$0xe]
        %v1188 = vld [vmem:[%s721 + $0x30] sm:$0xe]
        %v1189 = vld [vmem:[%s721 + $0x3c] sm:$0xe]
        %v1190 = vld [vmem:[%s721 + $0x48] sm:$0xe]
        %v1191 = vld [vmem:[%s721 + $0x54] sm:$0xe]
        %vm1208 = vcmask 1042432
        %vm1209 = vcmask 1046532
        %vm1210 = vmor %vm1208, %vm1209
        %v1211 = vrot.slane %v1184, 5
        %v1212 = vrot.slane %v1211, 4
        %v1213 = vrot.slane %v723, 5
        %v1214 = vsel %vm1210, %v1212, %v1213
        %v1215 = vrot.slane %v1213, 4
        %v1216 = vrot.slane %v742, 5
        %v1217 = vsel %vm1210, %v1215, %v1216
        %v1218 = vrot.slane %v1185, 5
        %v1219 = vrot.slane %v1218, 4
        %v1220 = vrot.slane %v725, 5
        %v1221 = vsel %vm1210, %v1219, %v1220
        %v1222 = vrot.slane %v1220, 4
        %v1223 = vrot.slane %v743, 5
        %v1224 = vsel %vm1210, %v1222, %v1223
        %v1225 = vrot.slane %v1186, 5
        %v1226 = vrot.slane %v1225, 4
        %v1227 = vrot.slane %v727, 5
        %v1228 = vsel %vm1210, %v1226, %v1227
        %v1229 = vrot.slane %v1227, 4
        %v1230 = vrot.slane %v744, 5
        %v1231 = vsel %vm1210, %v1229, %v1230
        %v1232 = vrot.slane %v1187, 5
        %v1233 = vrot.slane %v1232, 4
        %v1234 = vrot.slane %v729, 5
        %v1235 = vsel %vm1210, %v1233, %v1234
        %v1236 = vrot.slane %v1234, 4
        %v1237 = vrot.slane %v745, 5
        %v1238 = vsel %vm1210, %v1236, %v1237
        %v1239 = vrot.slane %v1188, 5
        %v1240 = vrot.slane %v1239, 4
        %v1241 = vrot.slane %v731, 5
        %v1242 = vsel %vm1210, %v1240, %v1241
        %v1243 = vrot.slane %v1241, 4
        %v1244 = vrot.slane %v746, 5
        %v1245 = vsel %vm1210, %v1243, %v1244
        %v1246 = vrot.slane %v1189, 5
        %v1247 = vrot.slane %v1246, 4
        %v1248 = vrot.slane %v733, 5
        %v1249 = vsel %vm1210, %v1247, %v1248
        %v1250 = vrot.slane %v1248, 4
        %v1251 = vrot.slane %v747, 5
        %v1252 = vsel %vm1210, %v1250, %v1251
        %v1253 = vrot.slane %v1190, 5
        %v1254 = vrot.slane %v1253, 4
        %v1255 = vrot.slane %v735, 5
        %v1256 = vsel %vm1210, %v1254, %v1255
        %v1257 = vrot.slane %v1255, 4
        %v1258 = vrot.slane %v748, 5
        %v1259 = vsel %vm1210, %v1257, %v1258
        %v1260 = vrot.slane %v1191, 5
        %v1261 = vrot.slane %v1260, 4
        %v1262 = vrot.slane %v737, 5
        %v1263 = vsel %vm1210, %v1261, %v1262
        %v1264 = vrot.slane %v1262, 4
        %v1265 = vrot.slane %v749, 5
        %v1266 = vsel %vm1210, %v1264, %v1265
        %v1267 = vld [vmem:[%s1 + $0x20] sm:$0xf]
        %v1268 = vld [vmem:[%s1 + $0x24] sm:$0xf]
        %v1269 = vld [vmem:[%s1 + $0x28] sm:$0xf]
        %v1270 = vld [vmem:[%s1 + $0x2c] sm:$0xf]
        %v1271 = vunpack.c.l.b16 %v1214
        %v1272 = vunpack.c.l.b16 %v1217
        %v1273 = vunpack.c.l.b16 %v1221
        %v1274 = vunpack.c.l.b16 %v1224
        %v1275 = vunpack.c.l.b16 %v1228
        %v1276 = vunpack.c.l.b16 %v1231
        %v1277 = vunpack.c.l.b16 %v1235
        %v1278 = vunpack.c.l.b16 %v1238
        %v1279 = vunpack.c.l.b16 %v1242
        %v1280 = vunpack.c.l.b16 %v1245
        %v1281 = vunpack.c.l.b16 %v1249
        %v1282 = vunpack.c.l.b16 %v1252
        %v1283 = vunpack.c.l.b16 %v1256
        %v1284 = vunpack.c.l.b16 %v1259
        %v1285 = vunpack.c.l.b16 %v1263
        %v1286 = vunpack.c.l.b16 %v1266
        %v1287 = vpack.c.b16 %v1272, %v1271
        %v1288 = vpack.c.b16 %v1274, %v1273
        %v1289 = vpack.c.b16 %v1276, %v1275
        %v1290 = vpack.c.b16 %v1278, %v1277
        %v1291 = vpack.c.b16 %v1280, %v1279
        %v1292 = vpack.c.b16 %v1282, %v1281
        %v1293 = vpack.c.b16 %v1284, %v1283
        %v1294 = vpack.c.b16 %v1286, %v1285
        %v1299 = vunpack.c.l.b16 %v1267
        %v1300 = vunpack.c.l.b16 %v1268
        %v1301 = vunpack.c.l.b16 %v1269
        %v1302 = vunpack.c.l.b16 %v1270
        %v1303 = vpack.c.b16 %v1300, %v1299
        %v1304 = vpack.c.b16 %v1302, %v1301
        %v1308 = vsel %vm985, %v1287, 0
        %v1311 = vsel %vm985, %v1288, 0
        %v1314 = vsel %vm985, %v1289, 0
        %v1317 = vsel %vm985, %v1290, 0
        %v1320 = vsel %vm985, %v1291, 0
        %v1323 = vsel %vm985, %v1292, 0
        %v1326 = vsel %vm985, %v1293, 0
        %v1329 = vsel %vm985, %v1294, 0
        %1331 = vmatpush.bf16.msra.mxu0 0
        %1332 = vmatpush.bf16.msra.mxu0 0
        %1333 = vmatpush.bf16.msra.mxu0 0
        %1334 = vmatpush.bf16.msra.mxu0 0
        %1335 = vmatpush.bf16.msra.mxu0 0
        %1336 = vmatpush.bf16.msra.mxu0 0
        %1337 = vmatpush.bf16.msra.mxu0 %v1304
        %1338 = vmatpush.bf16.msra.mxu0 %v1303
        %1339 = vmatmul.bf16.gmra.mxu0 %v1308
        %v1340 = vpop.f32.mrf.mxu0
        %v1341 = vadd.f32 0.0, %v1340
        %v1342 = vpop.f32.mrf.mxu0
        %v1343 = vadd.f32 0.0, %v1342
        %1344 = vmatmul.bf16.gmra.mxu0 %v1311
        %v1345 = vpop.f32.mrf.mxu0
        %v1346 = vadd.f32 0.0, %v1345
        %v1347 = vpop.f32.mrf.mxu0
        %v1348 = vadd.f32 0.0, %v1347
        %1349 = vmatmul.bf16.gmra.mxu0 %v1314
        %v1350 = vpop.f32.mrf.mxu0
        %v1351 = vadd.f32 0.0, %v1350
        %v1352 = vpop.f32.mrf.mxu0
        %v1353 = vadd.f32 0.0, %v1352
        %1354 = vmatmul.bf16.gmra.mxu0 %v1317
        %v1355 = vpop.f32.mrf.mxu0
        %v1356 = vadd.f32 0.0, %v1355
        %v1357 = vpop.f32.mrf.mxu0
        %v1358 = vadd.f32 0.0, %v1357
        %1359 = vmatmul.bf16.gmra.mxu0 %v1320
        %v1360 = vpop.f32.mrf.mxu0
        %v1361 = vadd.f32 0.0, %v1360
        %v1362 = vpop.f32.mrf.mxu0
        %v1363 = vadd.f32 0.0, %v1362
        %1364 = vmatmul.bf16.gmra.mxu0 %v1323
        %v1365 = vpop.f32.mrf.mxu0
        %v1366 = vadd.f32 0.0, %v1365
        %v1367 = vpop.f32.mrf.mxu0
        %v1368 = vadd.f32 0.0, %v1367
        %1369 = vmatmul.bf16.gmra.mxu0 %v1326
        %v1370 = vpop.f32.mrf.mxu0
        %v1371 = vadd.f32 0.0, %v1370
        %v1372 = vpop.f32.mrf.mxu0
        %v1373 = vadd.f32 0.0, %v1372
        %1374 = vmatmul.bf16.gmra.mxu0 %v1329
        %v1375 = vpop.f32.mrf.mxu0
        %v1376 = vadd.f32 0.0, %v1375
        %v1377 = vpop.f32.mrf.mxu0
        %v1378 = vadd.f32 0.0, %v1377
        %1379 = vdwg.mxu0
        %v1380 = vadd.f32 %v1145, %v1341
        %v1381 = vadd.f32 %v1147, %v1343
        %v1382 = vadd.f32 %v1150, %v1346
        %v1383 = vadd.f32 %v1152, %v1348
        %v1384 = vadd.f32 %v1155, %v1351
        %v1385 = vadd.f32 %v1157, %v1353
        %v1386 = vadd.f32 %v1160, %v1356
        %v1387 = vadd.f32 %v1162, %v1358
        %v1388 = vadd.f32 %v1165, %v1361
        %v1389 = vadd.f32 %v1167, %v1363
        %v1390 = vadd.f32 %v1170, %v1366
        %v1391 = vadd.f32 %v1172, %v1368
        %v1392 = vadd.f32 %v1175, %v1371
        %v1393 = vadd.f32 %v1177, %v1373
        %v1394 = vadd.f32 %v1180, %v1376
        %v1395 = vadd.f32 %v1182, %v1378
        %s1396 = sadd.s32 %s718, 1
        %s1397 = smul.u32 %s1396, 3
        %s1398 = smul.addr %s1397, 4
        %s1399 = scalar_lea.vmem [#allocation2], %s1398
        %v1400 = vld [vmem:[%s1399] sm:$0xf]
        %v1401 = vld [vmem:[%s1399 + $0x4] sm:$0xf]
        %v1402 = vld [vmem:[%s1399 + $0xc] sm:$0xf]
        %v1403 = vld [vmem:[%s1399 + $0x10] sm:$0xf]
        %v1404 = vld [vmem:[%s1399 + $0x18] sm:$0xf]
        %v1405 = vld [vmem:[%s1399 + $0x1c] sm:$0xf]
        %v1406 = vld [vmem:[%s1399 + $0x24] sm:$0xf]
        %v1407 = vld [vmem:[%s1399 + $0x28] sm:$0xf]
        %v1408 = vld [vmem:[%s1399 + $0x30] sm:$0xf]
        %v1409 = vld [vmem:[%s1399 + $0x34] sm:$0xf]
        %v1410 = vld [vmem:[%s1399 + $0x3c] sm:$0xf]
        %v1411 = vld [vmem:[%s1399 + $0x40] sm:$0xf]
        %v1412 = vld [vmem:[%s1399 + $0x48] sm:$0xf]
        %v1413 = vld [vmem:[%s1399 + $0x4c] sm:$0xf]
        %v1414 = vld [vmem:[%s1399 + $0x54] sm:$0xf]
        %v1415 = vld [vmem:[%s1399 + $0x58] sm:$0xf]
        %v1416 = vld [vmem:[%s1 + $0x30] sm:$0xf]
        %v1417 = vld [vmem:[%s1 + $0x34] sm:$0xf]
        %v1418 = vld [vmem:[%s1 + $0x38] sm:$0xf]
        %v1419 = vld [vmem:[%s1 + $0x3c] sm:$0xf]
        %v1436 = vunpack.c.l.b16 %v1400
        %v1437 = vunpack.c.l.b16 %v1401
        %v1438 = vunpack.c.l.b16 %v1402
        %v1439 = vunpack.c.l.b16 %v1403
        %v1440 = vunpack.c.l.b16 %v1404
        %v1441 = vunpack.c.l.b16 %v1405
        %v1442 = vunpack.c.l.b16 %v1406
        %v1443 = vunpack.c.l.b16 %v1407
        %v1444 = vunpack.c.l.b16 %v1408
        %v1445 = vunpack.c.l.b16 %v1409
        %v1446 = vunpack.c.l.b16 %v1410
        %v1447 = vunpack.c.l.b16 %v1411
        %v1448 = vunpack.c.l.b16 %v1412
        %v1449 = vunpack.c.l.b16 %v1413
        %v1450 = vunpack.c.l.b16 %v1414
        %v1451 = vunpack.c.l.b16 %v1415
        %v1452 = vpack.c.b16 %v1437, %v1436
        %v1453 = vpack.c.b16 %v1439, %v1438
        %v1454 = vpack.c.b16 %v1441, %v1440
        %v1455 = vpack.c.b16 %v1443, %v1442
        %v1456 = vpack.c.b16 %v1445, %v1444
        %v1457 = vpack.c.b16 %v1447, %v1446
        %v1458 = vpack.c.b16 %v1449, %v1448
        %v1459 = vpack.c.b16 %v1451, %v1450
        %v1464 = vunpack.c.l.b16 %v1416
        %v1465 = vunpack.c.l.b16 %v1417
        %v1466 = vunpack.c.l.b16 %v1418
        %v1467 = vunpack.c.l.b16 %v1419
        %v1468 = vpack.c.b16 %v1465, %v1464
        %v1469 = vpack.c.b16 %v1467, %v1466
        %v1473 = vsel %vm985, %v1452, 0
        %v1476 = vsel %vm985, %v1453, 0
        %v1479 = vsel %vm985, %v1454, 0
        %v1482 = vsel %vm985, %v1455, 0
        %v1485 = vsel %vm985, %v1456, 0
        %v1488 = vsel %vm985, %v1457, 0
        %v1491 = vsel %vm985, %v1458, 0
        %v1494 = vsel %vm985, %v1459, 0
        %1496 = vmatpush.bf16.msra.mxu0 0
        %1497 = vmatpush.bf16.msra.mxu0 0
        %1498 = vmatpush.bf16.msra.mxu0 0
        %1499 = vmatpush.bf16.msra.mxu0 0
        %1500 = vmatpush.bf16.msra.mxu0 0
        %1501 = vmatpush.bf16.msra.mxu0 0
        %1502 = vmatpush.bf16.msra.mxu0 %v1469
        %1503 = vmatpush.bf16.msra.mxu0 %v1468
        %1504 = vmatmul.bf16.gmra.mxu0 %v1473
        %v1505 = vpop.f32.mrf.mxu0
        %v1506 = vadd.f32 0.0, %v1505
        %v1507 = vpop.f32.mrf.mxu0
        %v1508 = vadd.f32 0.0, %v1507
        %1509 = vmatmul.bf16.gmra.mxu0 %v1476
        %v1510 = vpop.f32.mrf.mxu0
        %v1511 = vadd.f32 0.0, %v1510
        %v1512 = vpop.f32.mrf.mxu0
        %v1513 = vadd.f32 0.0, %v1512
        %1514 = vmatmul.bf16.gmra.mxu0 %v1479
        %v1515 = vpop.f32.mrf.mxu0
        %v1516 = vadd.f32 0.0, %v1515
        %v1517 = vpop.f32.mrf.mxu0
        %v1518 = vadd.f32 0.0, %v1517
        %1519 = vmatmul.bf16.gmra.mxu0 %v1482
        %v1520 = vpop.f32.mrf.mxu0
        %v1521 = vadd.f32 0.0, %v1520
        %v1522 = vpop.f32.mrf.mxu0
        %v1523 = vadd.f32 0.0, %v1522
        %1524 = vmatmul.bf16.gmra.mxu0 %v1485
        %v1525 = vpop.f32.mrf.mxu0
        %v1526 = vadd.f32 0.0, %v1525
        %v1527 = vpop.f32.mrf.mxu0
        %v1528 = vadd.f32 0.0, %v1527
        %1529 = vmatmul.bf16.gmra.mxu0 %v1488
        %v1530 = vpop.f32.mrf.mxu0
        %v1531 = vadd.f32 0.0, %v1530
        %v1532 = vpop.f32.mrf.mxu0
        %v1533 = vadd.f32 0.0, %v1532
        %1534 = vmatmul.bf16.gmra.mxu0 %v1491
        %v1535 = vpop.f32.mrf.mxu0
        %v1536 = vadd.f32 0.0, %v1535
        %v1537 = vpop.f32.mrf.mxu0
        %v1538 = vadd.f32 0.0, %v1537
        %1539 = vmatmul.bf16.gmra.mxu0 %v1494
        %v1540 = vpop.f32.mrf.mxu0
        %v1541 = vadd.f32 0.0, %v1540
        %v1542 = vpop.f32.mrf.mxu0
        %v1543 = vadd.f32 0.0, %v1542
        %1544 = vdwg.mxu0
        %v1545 = vadd.f32 %v1380, %v1506
        %v1546 = vadd.f32 %v1381, %v1508
        %v1547 = vadd.f32 %v1382, %v1511
        %v1548 = vadd.f32 %v1383, %v1513
        %v1549 = vadd.f32 %v1384, %v1516
        %v1550 = vadd.f32 %v1385, %v1518
        %v1551 = vadd.f32 %v1386, %v1521
        %v1552 = vadd.f32 %v1387, %v1523
        %v1553 = vadd.f32 %v1388, %v1526
        %v1554 = vadd.f32 %v1389, %v1528
        %v1555 = vadd.f32 %v1390, %v1531
        %v1556 = vadd.f32 %v1391, %v1533
        %v1557 = vadd.f32 %v1392, %v1536
        %v1558 = vadd.f32 %v1393, %v1538
        %v1559 = vadd.f32 %v1394, %v1541
        %v1560 = vadd.f32 %v1395, %v1543
        %v1561 = vld [vmem:[%s1399] sm:$0xf]
        %v1562 = vld [vmem:[%s1399 + $0x4] sm:$0xf]
        %v1563 = vld [vmem:[%s1399 + $0x8] sm:$0x1]
        %v1564 = vld [vmem:[%s1399 + $0xc] sm:$0xf]
        %v1565 = vld [vmem:[%s1399 + $0x10] sm:$0xf]
        %v1566 = vld [vmem:[%s1399 + $0x14] sm:$0x1]
        %v1567 = vld [vmem:[%s1399 + $0x18] sm:$0xf]
        %v1568 = vld [vmem:[%s1399 + $0x1c] sm:$0xf]
        %v1569 = vld [vmem:[%s1399 + $0x20] sm:$0x1]
        %v1570 = vld [vmem:[%s1399 + $0x24] sm:$0xf]
        %v1571 = vld [vmem:[%s1399 + $0x28] sm:$0xf]
        %v1572 = vld [vmem:[%s1399 + $0x2c] sm:$0x1]
        %v1573 = vld [vmem:[%s1399 + $0x30] sm:$0xf]
        %v1574 = vld [vmem:[%s1399 + $0x34] sm:$0xf]
        %v1575 = vld [vmem:[%s1399 + $0x38] sm:$0x1]
        %v1576 = vld [vmem:[%s1399 + $0x3c] sm:$0xf]
        %v1577 = vld [vmem:[%s1399 + $0x40] sm:$0xf]
        %v1578 = vld [vmem:[%s1399 + $0x44] sm:$0x1]
        %v1579 = vld [vmem:[%s1399 + $0x48] sm:$0xf]
        %v1580 = vld [vmem:[%s1399 + $0x4c] sm:$0xf]
        %v1581 = vld [vmem:[%s1399 + $0x50] sm:$0x1]
        %v1582 = vld [vmem:[%s1399 + $0x54] sm:$0xf]
        %v1583 = vld [vmem:[%s1399 + $0x58] sm:$0xf]
        %v1584 = vld [vmem:[%s1399 + $0x5c] sm:$0x1]
        %v1586 = vshrl.u32 %v1561, 16
        %v1588 = vrot.slane %v1586, 4
        %v1589 = vshll.u32 %v1561, 16
        %v1591 = vrot.slane %v1589, 5
        %v1592 = vor.u32 %v1588, %v1591
        %v1593 = vrot.slane %v1592, 4
        %v1595 = vshll.u32 %v1562, 16
        %v1597 = vrot.slane %v1595, 5
        %v1598 = vsel %vm752, %v1593, %v1597
        %v1599 = vshrl.u32 %v1562, 16
        %v1601 = vrot.slane %v1599, 4
        %v1602 = vor.u32 %v1601, %v1597
        %v1603 = vrot.slane %v1602, 4
        %v1605 = vshll.u32 %v1563, 16
        %v1607 = vrot.slane %v1605, 5
        %v1608 = vsel %vm752, %v1603, %v1607
        %v1610 = vshrl.u32 %v1564, 16
        %v1612 = vrot.slane %v1610, 4
        %v1613 = vshll.u32 %v1564, 16
        %v1615 = vrot.slane %v1613, 5
        %v1616 = vor.u32 %v1612, %v1615
        %v1617 = vrot.slane %v1616, 4
        %v1619 = vshll.u32 %v1565, 16
        %v1621 = vrot.slane %v1619, 5
        %v1622 = vsel %vm752, %v1617, %v1621
        %v1623 = vshrl.u32 %v1565, 16
        %v1625 = vrot.slane %v1623, 4
        %v1626 = vor.u32 %v1625, %v1621
        %v1627 = vrot.slane %v1626, 4
        %v1629 = vshll.u32 %v1566, 16
        %v1631 = vrot.slane %v1629, 5
        %v1632 = vsel %vm752, %v1627, %v1631
        %v1634 = vshrl.u32 %v1567, 16
        %v1636 = vrot.slane %v1634, 4
        %v1637 = vshll.u32 %v1567, 16
        %v1639 = vrot.slane %v1637, 5
        %v1640 = vor.u32 %v1636, %v1639
        %v1641 = vrot.slane %v1640, 4
        %v1643 = vshll.u32 %v1568, 16
        %v1645 = vrot.slane %v1643, 5
        %v1646 = vsel %vm752, %v1641, %v1645
        %v1647 = vshrl.u32 %v1568, 16
        %v1649 = vrot.slane %v1647, 4
        %v1650 = vor.u32 %v1649, %v1645
        %v1651 = vrot.slane %v1650, 4
        %v1653 = vshll.u32 %v1569, 16
        %v1655 = vrot.slane %v1653, 5
        %v1656 = vsel %vm752, %v1651, %v1655
        %v1658 = vshrl.u32 %v1570, 16
        %v1660 = vrot.slane %v1658, 4
        %v1661 = vshll.u32 %v1570, 16
        %v1663 = vrot.slane %v1661, 5
        %v1664 = vor.u32 %v1660, %v1663
        %v1665 = vrot.slane %v1664, 4
        %v1667 = vshll.u32 %v1571, 16
        %v1669 = vrot.slane %v1667, 5
        %v1670 = vsel %vm752, %v1665, %v1669
        %v1671 = vshrl.u32 %v1571, 16
        %v1673 = vrot.slane %v1671, 4
        %v1674 = vor.u32 %v1673, %v1669
        %v1675 = vrot.slane %v1674, 4
        %v1677 = vshll.u32 %v1572, 16
        %v1679 = vrot.slane %v1677, 5
        %v1680 = vsel %vm752, %v1675, %v1679
        %v1682 = vshrl.u32 %v1573, 16
        %v1684 = vrot.slane %v1682, 4
        %v1685 = vshll.u32 %v1573, 16
        %v1687 = vrot.slane %v1685, 5
        %v1688 = vor.u32 %v1684, %v1687
        %v1689 = vrot.slane %v1688, 4
        %v1691 = vshll.u32 %v1574, 16
        %v1693 = vrot.slane %v1691, 5
        %v1694 = vsel %vm752, %v1689, %v1693
        %v1695 = vshrl.u32 %v1574, 16
        %v1697 = vrot.slane %v1695, 4
        %v1698 = vor.u32 %v1697, %v1693
        %v1699 = vrot.slane %v1698, 4
        %v1701 = vshll.u32 %v1575, 16
        %v1703 = vrot.slane %v1701, 5
        %v1704 = vsel %vm752, %v1699, %v1703
        %v1706 = vshrl.u32 %v1576, 16
        %v1708 = vrot.slane %v1706, 4
        %v1709 = vshll.u32 %v1576, 16
        %v1711 = vrot.slane %v1709, 5
        %v1712 = vor.u32 %v1708, %v1711
        %v1713 = vrot.slane %v1712, 4
        %v1715 = vshll.u32 %v1577, 16
        %v1717 = vrot.slane %v1715, 5
        %v1718 = vsel %vm752, %v1713, %v1717
        %v1719 = vshrl.u32 %v1577, 16
        %v1721 = vrot.slane %v1719, 4
        %v1722 = vor.u32 %v1721, %v1717
        %v1723 = vrot.slane %v1722, 4
        %v1725 = vshll.u32 %v1578, 16
        %v1727 = vrot.slane %v1725, 5
        %v1728 = vsel %vm752, %v1723, %v1727
        %v1730 = vshrl.u32 %v1579, 16
        %v1732 = vrot.slane %v1730, 4
        %v1733 = vshll.u32 %v1579, 16
        %v1735 = vrot.slane %v1733, 5
        %v1736 = vor.u32 %v1732, %v1735
        %v1737 = vrot.slane %v1736, 4
        %v1739 = vshll.u32 %v1580, 16
        %v1741 = vrot.slane %v1739, 5
        %v1742 = vsel %vm752, %v1737, %v1741
        %v1743 = vshrl.u32 %v1580, 16
        %v1745 = vrot.slane %v1743, 4
        %v1746 = vor.u32 %v1745, %v1741
        %v1747 = vrot.slane %v1746, 4
        %v1749 = vshll.u32 %v1581, 16
        %v1751 = vrot.slane %v1749, 5
        %v1752 = vsel %vm752, %v1747, %v1751
        %v1754 = vshrl.u32 %v1582, 16
        %v1756 = vrot.slane %v1754, 4
        %v1757 = vshll.u32 %v1582, 16
        %v1759 = vrot.slane %v1757, 5
        %v1760 = vor.u32 %v1756, %v1759
        %v1761 = vrot.slane %v1760, 4
        %v1763 = vshll.u32 %v1583, 16
        %v1765 = vrot.slane %v1763, 5
        %v1766 = vsel %vm752, %v1761, %v1765
        %v1767 = vshrl.u32 %v1583, 16
        %v1769 = vrot.slane %v1767, 4
        %v1770 = vor.u32 %v1769, %v1765
        %v1771 = vrot.slane %v1770, 4
        %v1773 = vshll.u32 %v1584, 16
        %v1775 = vrot.slane %v1773, 5
        %v1776 = vsel %vm752, %v1771, %v1775
        %v1777 = vld [vmem:[%s1 + $0x40] sm:$0xf]
        %v1778 = vld [vmem:[%s1 + $0x44] sm:$0xf]
        %v1779 = vld [vmem:[%s1 + $0x48] sm:$0xf]
        %v1780 = vld [vmem:[%s1 + $0x4c] sm:$0xf]
        %v1781 = vunpack.c.l.b16 %v1598
        %v1782 = vunpack.c.l.b16 %v1608
        %v1783 = vunpack.c.l.b16 %v1622
        %v1784 = vunpack.c.l.b16 %v1632
        %v1785 = vunpack.c.l.b16 %v1646
        %v1786 = vunpack.c.l.b16 %v1656
        %v1787 = vunpack.c.l.b16 %v1670
        %v1788 = vunpack.c.l.b16 %v1680
        %v1789 = vunpack.c.l.b16 %v1694
        %v1790 = vunpack.c.l.b16 %v1704
        %v1791 = vunpack.c.l.b16 %v1718
        %v1792 = vunpack.c.l.b16 %v1728
        %v1793 = vunpack.c.l.b16 %v1742
        %v1794 = vunpack.c.l.b16 %v1752
        %v1795 = vunpack.c.l.b16 %v1766
        %v1796 = vunpack.c.l.b16 %v1776
        %v1797 = vpack.c.b16 %v1782, %v1781
        %v1798 = vpack.c.b16 %v1784, %v1783
        %v1799 = vpack.c.b16 %v1786, %v1785
        %v1800 = vpack.c.b16 %v1788, %v1787
        %v1801 = vpack.c.b16 %v1790, %v1789
        %v1802 = vpack.c.b16 %v1792, %v1791
        %v1803 = vpack.c.b16 %v1794, %v1793
        %v1804 = vpack.c.b16 %v1796, %v1795
        %v1809 = vunpack.c.l.b16 %v1777
        %v1810 = vunpack.c.l.b16 %v1778
        %v1811 = vunpack.c.l.b16 %v1779
        %v1812 = vunpack.c.l.b16 %v1780
        %v1813 = vpack.c.b16 %v1810, %v1809
        %v1814 = vpack.c.b16 %v1812, %v1811
        %v1818 = vsel %vm985, %v1797, 0
        %v1821 = vsel %vm985, %v1798, 0
        %v1824 = vsel %vm985, %v1799, 0
        %v1827 = vsel %vm985, %v1800, 0
        %v1830 = vsel %vm985, %v1801, 0
        %v1833 = vsel %vm985, %v1802, 0
        %v1836 = vsel %vm985, %v1803, 0
        %v1839 = vsel %vm985, %v1804, 0
        %1841 = vmatpush.bf16.msra.mxu0 0
        %1842 = vmatpush.bf16.msra.mxu0 0
        %1843 = vmatpush.bf16.msra.mxu0 0
        %1844 = vmatpush.bf16.msra.mxu0 0
        %1845 = vmatpush.bf16.msra.mxu0 0
        %1846 = vmatpush.bf16.msra.mxu0 0
        %1847 = vmatpush.bf16.msra.mxu0 %v1814
        %1848 = vmatpush.bf16.msra.mxu0 %v1813
        %1849 = vmatmul.bf16.gmra.mxu0 %v1818
        %v1850 = vpop.f32.mrf.mxu0
        %v1851 = vadd.f32 0.0, %v1850
        %v1852 = vpop.f32.mrf.mxu0
        %v1853 = vadd.f32 0.0, %v1852
        %1854 = vmatmul.bf16.gmra.mxu0 %v1821
        %v1855 = vpop.f32.mrf.mxu0
        %v1856 = vadd.f32 0.0, %v1855
        %v1857 = vpop.f32.mrf.mxu0
        %v1858 = vadd.f32 0.0, %v1857
        %1859 = vmatmul.bf16.gmra.mxu0 %v1824
        %v1860 = vpop.f32.mrf.mxu0
        %v1861 = vadd.f32 0.0, %v1860
        %v1862 = vpop.f32.mrf.mxu0
        %v1863 = vadd.f32 0.0, %v1862
        %1864 = vmatmul.bf16.gmra.mxu0 %v1827
        %v1865 = vpop.f32.mrf.mxu0
        %v1866 = vadd.f32 0.0, %v1865
        %v1867 = vpop.f32.mrf.mxu0
        %v1868 = vadd.f32 0.0, %v1867
        %1869 = vmatmul.bf16.gmra.mxu0 %v1830
        %v1870 = vpop.f32.mrf.mxu0
        %v1871 = vadd.f32 0.0, %v1870
        %v1872 = vpop.f32.mrf.mxu0
        %v1873 = vadd.f32 0.0, %v1872
        %1874 = vmatmul.bf16.gmra.mxu0 %v1833
        %v1875 = vpop.f32.mrf.mxu0
        %v1876 = vadd.f32 0.0, %v1875
        %v1877 = vpop.f32.mrf.mxu0
        %v1878 = vadd.f32 0.0, %v1877
        %1879 = vmatmul.bf16.gmra.mxu0 %v1836
        %v1880 = vpop.f32.mrf.mxu0
        %v1881 = vadd.f32 0.0, %v1880
        %v1882 = vpop.f32.mrf.mxu0
        %v1883 = vadd.f32 0.0, %v1882
        %1884 = vmatmul.bf16.gmra.mxu0 %v1839
        %v1885 = vpop.f32.mrf.mxu0
        %v1886 = vadd.f32 0.0, %v1885
        %v1887 = vpop.f32.mrf.mxu0
        %v1888 = vadd.f32 0.0, %v1887
        %1889 = vdwg.mxu0
        %v1890 = vadd.f32 %v1545, %v1851
        %v1891 = vadd.f32 %v1546, %v1853
        %v1892 = vadd.f32 %v1547, %v1856
        %v1893 = vadd.f32 %v1548, %v1858
        %v1894 = vadd.f32 %v1549, %v1861
        %v1895 = vadd.f32 %v1550, %v1863
        %v1896 = vadd.f32 %v1551, %v1866
        %v1897 = vadd.f32 %v1552, %v1868
        %v1898 = vadd.f32 %v1553, %v1871
        %v1899 = vadd.f32 %v1554, %v1873
        %v1900 = vadd.f32 %v1555, %v1876
        %v1901 = vadd.f32 %v1556, %v1878
        %v1902 = vadd.f32 %v1557, %v1881
        %v1903 = vadd.f32 %v1558, %v1883
        %v1904 = vadd.f32 %v1559, %v1886
        %v1905 = vadd.f32 %v1560, %v1888
        %v1906 = vld [vmem:[%s1399] sm:$0xe]
        %v1907 = vld [vmem:[%s1399 + $0xc] sm:$0xe]
        %v1908 = vld [vmem:[%s1399 + $0x18] sm:$0xe]
        %v1909 = vld [vmem:[%s1399 + $0x24] sm:$0xe]
        %v1910 = vld [vmem:[%s1399 + $0x30] sm:$0xe]
        %v1911 = vld [vmem:[%s1399 + $0x3c] sm:$0xe]
        %v1912 = vld [vmem:[%s1399 + $0x48] sm:$0xe]
        %v1913 = vld [vmem:[%s1399 + $0x54] sm:$0xe]
        %v1938 = vrot.slane %v1906, 5
        %v1939 = vrot.slane %v1938, 4
        %v1940 = vrot.slane %v1562, 5
        %v1941 = vsel %vm1210, %v1939, %v1940
        %v1942 = vrot.slane %v1940, 4
        %v1943 = vrot.slane %v1563, 5
        %v1944 = vsel %vm1210, %v1942, %v1943
        %v1945 = vrot.slane %v1907, 5
        %v1946 = vrot.slane %v1945, 4
        %v1947 = vrot.slane %v1565, 5
        %v1948 = vsel %vm1210, %v1946, %v1947
        %v1949 = vrot.slane %v1947, 4
        %v1950 = vrot.slane %v1566, 5
        %v1951 = vsel %vm1210, %v1949, %v1950
        %v1952 = vrot.slane %v1908, 5
        %v1953 = vrot.slane %v1952, 4
        %v1954 = vrot.slane %v1568, 5
        %v1955 = vsel %vm1210, %v1953, %v1954
        %v1956 = vrot.slane %v1954, 4
        %v1957 = vrot.slane %v1569, 5
        %v1958 = vsel %vm1210, %v1956, %v1957
        %v1959 = vrot.slane %v1909, 5
        %v1960 = vrot.slane %v1959, 4
        %v1961 = vrot.slane %v1571, 5
        %v1962 = vsel %vm1210, %v1960, %v1961
        %v1963 = vrot.slane %v1961, 4
        %v1964 = vrot.slane %v1572, 5
        %v1965 = vsel %vm1210, %v1963, %v1964
        %v1966 = vrot.slane %v1910, 5
        %v1967 = vrot.slane %v1966, 4
        %v1968 = vrot.slane %v1574, 5
        %v1969 = vsel %vm1210, %v1967, %v1968
        %v1970 = vrot.slane %v1968, 4
        %v1971 = vrot.slane %v1575, 5
        %v1972 = vsel %vm1210, %v1970, %v1971
        %v1973 = vrot.slane %v1911, 5
        %v1974 = vrot.slane %v1973, 4
        %v1975 = vrot.slane %v1577, 5
        %v1976 = vsel %vm1210, %v1974, %v1975
        %v1977 = vrot.slane %v1975, 4
        %v1978 = vrot.slane %v1578, 5
        %v1979 = vsel %vm1210, %v1977, %v1978
        %v1980 = vrot.slane %v1912, 5
        %v1981 = vrot.slane %v1980, 4
        %v1982 = vrot.slane %v1580, 5
        %v1983 = vsel %vm1210, %v1981, %v1982
        %v1984 = vrot.slane %v1982, 4
        %v1985 = vrot.slane %v1581, 5
        %v1986 = vsel %vm1210, %v1984, %v1985
        %v1987 = vrot.slane %v1913, 5
        %v1988 = vrot.slane %v1987, 4
        %v1989 = vrot.slane %v1583, 5
        %v1990 = vsel %vm1210, %v1988, %v1989
        %v1991 = vrot.slane %v1989, 4
        %v1992 = vrot.slane %v1584, 5
        %v1993 = vsel %vm1210, %v1991, %v1992
        %v1994 = vld [vmem:[%s1 + $0x50] sm:$0xf]
        %v1995 = vld [vmem:[%s1 + $0x54] sm:$0xf]
        %v1996 = vld [vmem:[%s1 + $0x58] sm:$0xf]
        %v1997 = vld [vmem:[%s1 + $0x5c] sm:$0xf]
        %v1998 = vunpack.c.l.b16 %v1941
        %v1999 = vunpack.c.l.b16 %v1944
        %v2000 = vunpack.c.l.b16 %v1948
        %v2001 = vunpack.c.l.b16 %v1951
        %v2002 = vunpack.c.l.b16 %v1955
        %v2003 = vunpack.c.l.b16 %v1958
        %v2004 = vunpack.c.l.b16 %v1962
        %v2005 = vunpack.c.l.b16 %v1965
        %v2006 = vunpack.c.l.b16 %v1969
        %v2007 = vunpack.c.l.b16 %v1972
        %v2008 = vunpack.c.l.b16 %v1976
        %v2009 = vunpack.c.l.b16 %v1979
        %v2010 = vunpack.c.l.b16 %v1983
        %v2011 = vunpack.c.l.b16 %v1986
        %v2012 = vunpack.c.l.b16 %v1990
        %v2013 = vunpack.c.l.b16 %v1993
        %v2014 = vpack.c.b16 %v1999, %v1998
        %v2015 = vpack.c.b16 %v2001, %v2000
        %v2016 = vpack.c.b16 %v2003, %v2002
        %v2017 = vpack.c.b16 %v2005, %v2004
        %v2018 = vpack.c.b16 %v2007, %v2006
        %v2019 = vpack.c.b16 %v2009, %v2008
        %v2020 = vpack.c.b16 %v2011, %v2010
        %v2021 = vpack.c.b16 %v2013, %v2012
        %v2026 = vunpack.c.l.b16 %v1994
        %v2027 = vunpack.c.l.b16 %v1995
        %v2028 = vunpack.c.l.b16 %v1996
        %v2029 = vunpack.c.l.b16 %v1997
        %v2030 = vpack.c.b16 %v2027, %v2026
        %v2031 = vpack.c.b16 %v2029, %v2028
        %v2035 = vsel %vm985, %v2014, 0
        %v2038 = vsel %vm985, %v2015, 0
        %v2041 = vsel %vm985, %v2016, 0
        %v2044 = vsel %vm985, %v2017, 0
        %v2047 = vsel %vm985, %v2018, 0
        %v2050 = vsel %vm985, %v2019, 0
        %v2053 = vsel %vm985, %v2020, 0
        %v2056 = vsel %vm985, %v2021, 0
        %2058 = vmatpush.bf16.msra.mxu0 0
        %2059 = vmatpush.bf16.msra.mxu0 0
        %2060 = vmatpush.bf16.msra.mxu0 0
        %2061 = vmatpush.bf16.msra.mxu0 0
        %2062 = vmatpush.bf16.msra.mxu0 0
        %2063 = vmatpush.bf16.msra.mxu0 0
        %2064 = vmatpush.bf16.msra.mxu0 %v2031
        %2065 = vmatpush.bf16.msra.mxu0 %v2030
        %2066 = vmatmul.bf16.gmra.mxu0 %v2035
        %v2067 = vpop.f32.mrf.mxu0
        %v2068 = vadd.f32 0.0, %v2067
        %v2069 = vpop.f32.mrf.mxu0
        %v2070 = vadd.f32 0.0, %v2069
        %2071 = vmatmul.bf16.gmra.mxu0 %v2038
        %v2072 = vpop.f32.mrf.mxu0
        %v2073 = vadd.f32 0.0, %v2072
        %v2074 = vpop.f32.mrf.mxu0
        %v2075 = vadd.f32 0.0, %v2074
        %2076 = vmatmul.bf16.gmra.mxu0 %v2041
        %v2077 = vpop.f32.mrf.mxu0
        %v2078 = vadd.f32 0.0, %v2077
        %v2079 = vpop.f32.mrf.mxu0
        %v2080 = vadd.f32 0.0, %v2079
        %2081 = vmatmul.bf16.gmra.mxu0 %v2044
        %v2082 = vpop.f32.mrf.mxu0
        %v2083 = vadd.f32 0.0, %v2082
        %v2084 = vpop.f32.mrf.mxu0
        %v2085 = vadd.f32 0.0, %v2084
        %2086 = vmatmul.bf16.gmra.mxu0 %v2047
        %v2087 = vpop.f32.mrf.mxu0
        %v2088 = vadd.f32 0.0, %v2087
        %v2089 = vpop.f32.mrf.mxu0
        %v2090 = vadd.f32 0.0, %v2089
        %2091 = vmatmul.bf16.gmra.mxu0 %v2050
        %v2092 = vpop.f32.mrf.mxu0
        %v2093 = vadd.f32 0.0, %v2092
        %v2094 = vpop.f32.mrf.mxu0
        %v2095 = vadd.f32 0.0, %v2094
        %2096 = vmatmul.bf16.gmra.mxu0 %v2053
        %v2097 = vpop.f32.mrf.mxu0
        %v2098 = vadd.f32 0.0, %v2097
        %v2099 = vpop.f32.mrf.mxu0
        %v2100 = vadd.f32 0.0, %v2099
        %2101 = vmatmul.bf16.gmra.mxu0 %v2056
        %v2102 = vpop.f32.mrf.mxu0
        %v2103 = vadd.f32 0.0, %v2102
        %v2104 = vpop.f32.mrf.mxu0
        %v2105 = vadd.f32 0.0, %v2104
        %2106 = vdwg.mxu0
        %v2107 = vadd.f32 %v1890, %v2068
        %v2108 = vadd.f32 %v1891, %v2070
        %v2109 = vadd.f32 %v1892, %v2073
        %v2110 = vadd.f32 %v1893, %v2075
        %v2111 = vadd.f32 %v1894, %v2078
        %v2112 = vadd.f32 %v1895, %v2080
        %v2113 = vadd.f32 %v1896, %v2083
        %v2114 = vadd.f32 %v1897, %v2085
        %v2115 = vadd.f32 %v1898, %v2088
        %v2116 = vadd.f32 %v1899, %v2090
        %v2117 = vadd.f32 %v1900, %v2093
        %v2118 = vadd.f32 %v1901, %v2095
        %v2119 = vadd.f32 %v1902, %v2098
        %v2120 = vadd.f32 %v1903, %v2100
        %v2121 = vadd.f32 %v1904, %v2103
        %v2122 = vadd.f32 %v1905, %v2105
        %s2123 = sadd.s32 %s718, 2
        %s2124 = smul.u32 %s2123, 3
        %s2125 = smul.addr %s2124, 4
        %s2126 = scalar_lea.vmem [#allocation2], %s2125
        %v2127 = vld [vmem:[%s2126] sm:$0xf]
        %v2128 = vld [vmem:[%s2126 + $0x4] sm:$0xf]
        %v2129 = vld [vmem:[%s2126 + $0xc] sm:$0xf]
        %v2130 = vld [vmem:[%s2126 + $0x10] sm:$0xf]
        %v2131 = vld [vmem:[%s2126 + $0x18] sm:$0xf]
        %v2132 = vld [vmem:[%s2126 + $0x1c] sm:$0xf]
        %v2133 = vld [vmem:[%s2126 + $0x24] sm:$0xf]
        %v2134 = vld [vmem:[%s2126 + $0x28] sm:$0xf]
        %v2135 = vld [vmem:[%s2126 + $0x30] sm:$0xf]
        %v2136 = vld [vmem:[%s2126 + $0x34] sm:$0xf]
        %v2137 = vld [vmem:[%s2126 + $0x3c] sm:$0xf]
        %v2138 = vld [vmem:[%s2126 + $0x40] sm:$0xf]
        %v2139 = vld [vmem:[%s2126 + $0x48] sm:$0xf]
        %v2140 = vld [vmem:[%s2126 + $0x4c] sm:$0xf]
        %v2141 = vld [vmem:[%s2126 + $0x54] sm:$0xf]
        %v2142 = vld [vmem:[%s2126 + $0x58] sm:$0xf]
        %v2143 = vld [vmem:[%s1 + $0x60] sm:$0xf]
        %v2144 = vld [vmem:[%s1 + $0x64] sm:$0xf]
        %v2145 = vld [vmem:[%s1 + $0x68] sm:$0xf]
        %v2146 = vld [vmem:[%s1 + $0x6c] sm:$0xf]
        %v2163 = vunpack.c.l.b16 %v2127
        %v2164 = vunpack.c.l.b16 %v2128
        %v2165 = vunpack.c.l.b16 %v2129
        %v2166 = vunpack.c.l.b16 %v2130
        %v2167 = vunpack.c.l.b16 %v2131
        %v2168 = vunpack.c.l.b16 %v2132
        %v2169 = vunpack.c.l.b16 %v2133
        %v2170 = vunpack.c.l.b16 %v2134
        %v2171 = vunpack.c.l.b16 %v2135
        %v2172 = vunpack.c.l.b16 %v2136
        %v2173 = vunpack.c.l.b16 %v2137
        %v2174 = vunpack.c.l.b16 %v2138
        %v2175 = vunpack.c.l.b16 %v2139
        %v2176 = vunpack.c.l.b16 %v2140
        %v2177 = vunpack.c.l.b16 %v2141
        %v2178 = vunpack.c.l.b16 %v2142
        %v2179 = vpack.c.b16 %v2164, %v2163
        %v2180 = vpack.c.b16 %v2166, %v2165
        %v2181 = vpack.c.b16 %v2168, %v2167
        %v2182 = vpack.c.b16 %v2170, %v2169
        %v2183 = vpack.c.b16 %v2172, %v2171
        %v2184 = vpack.c.b16 %v2174, %v2173
        %v2185 = vpack.c.b16 %v2176, %v2175
        %v2186 = vpack.c.b16 %v2178, %v2177
        %v2191 = vunpack.c.l.b16 %v2143
        %v2192 = vunpack.c.l.b16 %v2144
        %v2193 = vunpack.c.l.b16 %v2145
        %v2194 = vunpack.c.l.b16 %v2146
        %v2195 = vpack.c.b16 %v2192, %v2191
        %v2196 = vpack.c.b16 %v2194, %v2193
        %v2200 = vsel %vm985, %v2179, 0
        %v2203 = vsel %vm985, %v2180, 0
        %v2206 = vsel %vm985, %v2181, 0
        %v2209 = vsel %vm985, %v2182, 0
        %v2212 = vsel %vm985, %v2183, 0
        %v2215 = vsel %vm985, %v2184, 0
        %v2218 = vsel %vm985, %v2185, 0
        %v2221 = vsel %vm985, %v2186, 0
        %2223 = vmatpush.bf16.msra.mxu0 0
        %2224 = vmatpush.bf16.msra.mxu0 0
        %2225 = vmatpush.bf16.msra.mxu0 0
        %2226 = vmatpush.bf16.msra.mxu0 0
        %2227 = vmatpush.bf16.msra.mxu0 0
        %2228 = vmatpush.bf16.msra.mxu0 0
        %2229 = vmatpush.bf16.msra.mxu0 %v2196
        %2230 = vmatpush.bf16.msra.mxu0 %v2195
        %2231 = vmatmul.bf16.gmra.mxu0 %v2200
        %v2232 = vpop.f32.mrf.mxu0
        %v2233 = vadd.f32 0.0, %v2232
        %v2234 = vpop.f32.mrf.mxu0
        %v2235 = vadd.f32 0.0, %v2234
        %2236 = vmatmul.bf16.gmra.mxu0 %v2203
        %v2237 = vpop.f32.mrf.mxu0
        %v2238 = vadd.f32 0.0, %v2237
        %v2239 = vpop.f32.mrf.mxu0
        %v2240 = vadd.f32 0.0, %v2239
        %2241 = vmatmul.bf16.gmra.mxu0 %v2206
        %v2242 = vpop.f32.mrf.mxu0
        %v2243 = vadd.f32 0.0, %v2242
        %v2244 = vpop.f32.mrf.mxu0
        %v2245 = vadd.f32 0.0, %v2244
        %2246 = vmatmul.bf16.gmra.mxu0 %v2209
        %v2247 = vpop.f32.mrf.mxu0
        %v2248 = vadd.f32 0.0, %v2247
        %v2249 = vpop.f32.mrf.mxu0
        %v2250 = vadd.f32 0.0, %v2249
        %2251 = vmatmul.bf16.gmra.mxu0 %v2212
        %v2252 = vpop.f32.mrf.mxu0
        %v2253 = vadd.f32 0.0, %v2252
        %v2254 = vpop.f32.mrf.mxu0
        %v2255 = vadd.f32 0.0, %v2254
        %2256 = vmatmul.bf16.gmra.mxu0 %v2215
        %v2257 = vpop.f32.mrf.mxu0
        %v2258 = vadd.f32 0.0, %v2257
        %v2259 = vpop.f32.mrf.mxu0
        %v2260 = vadd.f32 0.0, %v2259
        %2261 = vmatmul.bf16.gmra.mxu0 %v2218
        %v2262 = vpop.f32.mrf.mxu0
        %v2263 = vadd.f32 0.0, %v2262
        %v2264 = vpop.f32.mrf.mxu0
        %v2265 = vadd.f32 0.0, %v2264
        %2266 = vmatmul.bf16.gmra.mxu0 %v2221
        %v2267 = vpop.f32.mrf.mxu0
        %v2268 = vadd.f32 0.0, %v2267
        %v2269 = vpop.f32.mrf.mxu0
        %v2270 = vadd.f32 0.0, %v2269
        %2271 = vdwg.mxu0
        %v2272 = vadd.f32 %v2107, %v2233
        %v2273 = vadd.f32 %v2108, %v2235
        %v2274 = vadd.f32 %v2109, %v2238
        %v2275 = vadd.f32 %v2110, %v2240
        %v2276 = vadd.f32 %v2111, %v2243
        %v2277 = vadd.f32 %v2112, %v2245
        %v2278 = vadd.f32 %v2113, %v2248
        %v2279 = vadd.f32 %v2114, %v2250
        %v2280 = vadd.f32 %v2115, %v2253
        %v2281 = vadd.f32 %v2116, %v2255
        %v2282 = vadd.f32 %v2117, %v2258
        %v2283 = vadd.f32 %v2118, %v2260
        %v2284 = vadd.f32 %v2119, %v2263
        %v2285 = vadd.f32 %v2120, %v2265
        %v2286 = vadd.f32 %v2121, %v2268
        %v2287 = vadd.f32 %v2122, %v2270
        %v2288 = vld [vmem:[%s2126] sm:$0xf]
        %v2289 = vld [vmem:[%s2126 + $0x4] sm:$0xf]
        %v2290 = vld [vmem:[%s2126 + $0x8] sm:$0x1]
        %v2291 = vld [vmem:[%s2126 + $0xc] sm:$0xf]
        %v2292 = vld [vmem:[%s2126 + $0x10] sm:$0xf]
        %v2293 = vld [vmem:[%s2126 + $0x14] sm:$0x1]
        %v2294 = vld [vmem:[%s2126 + $0x18] sm:$0xf]
        %v2295 = vld [vmem:[%s2126 + $0x1c] sm:$0xf]
        %v2296 = vld [vmem:[%s2126 + $0x20] sm:$0x1]
        %v2297 = vld [vmem:[%s2126 + $0x24] sm:$0xf]
        %v2298 = vld [vmem:[%s2126 + $0x28] sm:$0xf]
        %v2299 = vld [vmem:[%s2126 + $0x2c] sm:$0x1]
        %v2300 = vld [vmem:[%s2126 + $0x30] sm:$0xf]
        %v2301 = vld [vmem:[%s2126 + $0x34] sm:$0xf]
        %v2302 = vld [vmem:[%s2126 + $0x38] sm:$0x1]
        %v2303 = vld [vmem:[%s2126 + $0x3c] sm:$0xf]
        %v2304 = vld [vmem:[%s2126 + $0x40] sm:$0xf]
        %v2305 = vld [vmem:[%s2126 + $0x44] sm:$0x1]
        %v2306 = vld [vmem:[%s2126 + $0x48] sm:$0xf]
        %v2307 = vld [vmem:[%s2126 + $0x4c] sm:$0xf]
        %v2308 = vld [vmem:[%s2126 + $0x50] sm:$0x1]
        %v2309 = vld [vmem:[%s2126 + $0x54] sm:$0xf]
        %v2310 = vld [vmem:[%s2126 + $0x58] sm:$0xf]
        %v2311 = vld [vmem:[%s2126 + $0x5c] sm:$0x1]
        %v2313 = vshrl.u32 %v2288, 16
        %v2315 = vrot.slane %v2313, 4
        %v2316 = vshll.u32 %v2288, 16
        %v2318 = vrot.slane %v2316, 5
        %v2319 = vor.u32 %v2315, %v2318
        %v2320 = vrot.slane %v2319, 4
        %v2322 = vshll.u32 %v2289, 16
        %v2324 = vrot.slane %v2322, 5
        %v2325 = vsel %vm752, %v2320, %v2324
        %v2326 = vshrl.u32 %v2289, 16
        %v2328 = vrot.slane %v2326, 4
        %v2329 = vor.u32 %v2328, %v2324
        %v2330 = vrot.slane %v2329, 4
        %v2332 = vshll.u32 %v2290, 16
        %v2334 = vrot.slane %v2332, 5
        %v2335 = vsel %vm752, %v2330, %v2334
        %v2337 = vshrl.u32 %v2291, 16
        %v2339 = vrot.slane %v2337, 4
        %v2340 = vshll.u32 %v2291, 16
        %v2342 = vrot.slane %v2340, 5
        %v2343 = vor.u32 %v2339, %v2342
        %v2344 = vrot.slane %v2343, 4
        %v2346 = vshll.u32 %v2292, 16
        %v2348 = vrot.slane %v2346, 5
        %v2349 = vsel %vm752, %v2344, %v2348
        %v2350 = vshrl.u32 %v2292, 16
        %v2352 = vrot.slane %v2350, 4
        %v2353 = vor.u32 %v2352, %v2348
        %v2354 = vrot.slane %v2353, 4
        %v2356 = vshll.u32 %v2293, 16
        %v2358 = vrot.slane %v2356, 5
        %v2359 = vsel %vm752, %v2354, %v2358
        %v2361 = vshrl.u32 %v2294, 16
        %v2363 = vrot.slane %v2361, 4
        %v2364 = vshll.u32 %v2294, 16
        %v2366 = vrot.slane %v2364, 5
        %v2367 = vor.u32 %v2363, %v2366
        %v2368 = vrot.slane %v2367, 4
        %v2370 = vshll.u32 %v2295, 16
        %v2372 = vrot.slane %v2370, 5
        %v2373 = vsel %vm752, %v2368, %v2372
        %v2374 = vshrl.u32 %v2295, 16
        %v2376 = vrot.slane %v2374, 4
        %v2377 = vor.u32 %v2376, %v2372
        %v2378 = vrot.slane %v2377, 4
        %v2380 = vshll.u32 %v2296, 16
        %v2382 = vrot.slane %v2380, 5
        %v2383 = vsel %vm752, %v2378, %v2382
        %v2385 = vshrl.u32 %v2297, 16
        %v2387 = vrot.slane %v2385, 4
        %v2388 = vshll.u32 %v2297, 16
        %v2390 = vrot.slane %v2388, 5
        %v2391 = vor.u32 %v2387, %v2390
        %v2392 = vrot.slane %v2391, 4
        %v2394 = vshll.u32 %v2298, 16
        %v2396 = vrot.slane %v2394, 5
        %v2397 = vsel %vm752, %v2392, %v2396
        %v2398 = vshrl.u32 %v2298, 16
        %v2400 = vrot.slane %v2398, 4
        %v2401 = vor.u32 %v2400, %v2396
        %v2402 = vrot.slane %v2401, 4
        %v2404 = vshll.u32 %v2299, 16
        %v2406 = vrot.slane %v2404, 5
        %v2407 = vsel %vm752, %v2402, %v2406
        %v2409 = vshrl.u32 %v2300, 16
        %v2411 = vrot.slane %v2409, 4
        %v2412 = vshll.u32 %v2300, 16
        %v2414 = vrot.slane %v2412, 5
        %v2415 = vor.u32 %v2411, %v2414
        %v2416 = vrot.slane %v2415, 4
        %v2418 = vshll.u32 %v2301, 16
        %v2420 = vrot.slane %v2418, 5
        %v2421 = vsel %vm752, %v2416, %v2420
        %v2422 = vshrl.u32 %v2301, 16
        %v2424 = vrot.slane %v2422, 4
        %v2425 = vor.u32 %v2424, %v2420
        %v2426 = vrot.slane %v2425, 4
        %v2428 = vshll.u32 %v2302, 16
        %v2430 = vrot.slane %v2428, 5
        %v2431 = vsel %vm752, %v2426, %v2430
        %v2433 = vshrl.u32 %v2303, 16
        %v2435 = vrot.slane %v2433, 4
        %v2436 = vshll.u32 %v2303, 16
        %v2438 = vrot.slane %v2436, 5
        %v2439 = vor.u32 %v2435, %v2438
        %v2440 = vrot.slane %v2439, 4
        %v2442 = vshll.u32 %v2304, 16
        %v2444 = vrot.slane %v2442, 5
        %v2445 = vsel %vm752, %v2440, %v2444
        %v2446 = vshrl.u32 %v2304, 16
        %v2448 = vrot.slane %v2446, 4
        %v2449 = vor.u32 %v2448, %v2444
        %v2450 = vrot.slane %v2449, 4
        %v2452 = vshll.u32 %v2305, 16
        %v2454 = vrot.slane %v2452, 5
        %v2455 = vsel %vm752, %v2450, %v2454
        %v2457 = vshrl.u32 %v2306, 16
        %v2459 = vrot.slane %v2457, 4
        %v2460 = vshll.u32 %v2306, 16
        %v2462 = vrot.slane %v2460, 5
        %v2463 = vor.u32 %v2459, %v2462
        %v2464 = vrot.slane %v2463, 4
        %v2466 = vshll.u32 %v2307, 16
        %v2468 = vrot.slane %v2466, 5
        %v2469 = vsel %vm752, %v2464, %v2468
        %v2470 = vshrl.u32 %v2307, 16
        %v2472 = vrot.slane %v2470, 4
        %v2473 = vor.u32 %v2472, %v2468
        %v2474 = vrot.slane %v2473, 4
        %v2476 = vshll.u32 %v2308, 16
        %v2478 = vrot.slane %v2476, 5
        %v2479 = vsel %vm752, %v2474, %v2478
        %v2481 = vshrl.u32 %v2309, 16
        %v2483 = vrot.slane %v2481, 4
        %v2484 = vshll.u32 %v2309, 16
        %v2486 = vrot.slane %v2484, 5
        %v2487 = vor.u32 %v2483, %v2486
        %v2488 = vrot.slane %v2487, 4
        %v2490 = vshll.u32 %v2310, 16
        %v2492 = vrot.slane %v2490, 5
        %v2493 = vsel %vm752, %v2488, %v2492
        %v2494 = vshrl.u32 %v2310, 16
        %v2496 = vrot.slane %v2494, 4
        %v2497 = vor.u32 %v2496, %v2492
        %v2498 = vrot.slane %v2497, 4
        %v2500 = vshll.u32 %v2311, 16
        %v2502 = vrot.slane %v2500, 5
        %v2503 = vsel %vm752, %v2498, %v2502
        %v2504 = vld [vmem:[%s1 + $0x70] sm:$0xf]
        %v2505 = vld [vmem:[%s1 + $0x74] sm:$0xf]
        %v2506 = vld [vmem:[%s1 + $0x78] sm:$0xf]
        %v2507 = vld [vmem:[%s1 + $0x7c] sm:$0xf]
        %v2508 = vunpack.c.l.b16 %v2325
        %v2509 = vunpack.c.l.b16 %v2335
        %v2510 = vunpack.c.l.b16 %v2349
        %v2511 = vunpack.c.l.b16 %v2359
        %v2512 = vunpack.c.l.b16 %v2373
        %v2513 = vunpack.c.l.b16 %v2383
        %v2514 = vunpack.c.l.b16 %v2397
        %v2515 = vunpack.c.l.b16 %v2407
        %v2516 = vunpack.c.l.b16 %v2421
        %v2517 = vunpack.c.l.b16 %v2431
        %v2518 = vunpack.c.l.b16 %v2445
        %v2519 = vunpack.c.l.b16 %v2455
        %v2520 = vunpack.c.l.b16 %v2469
        %v2521 = vunpack.c.l.b16 %v2479
        %v2522 = vunpack.c.l.b16 %v2493
        %v2523 = vunpack.c.l.b16 %v2503
        %v2524 = vpack.c.b16 %v2509, %v2508
        %v2525 = vpack.c.b16 %v2511, %v2510
        %v2526 = vpack.c.b16 %v2513, %v2512
        %v2527 = vpack.c.b16 %v2515, %v2514
        %v2528 = vpack.c.b16 %v2517, %v2516
        %v2529 = vpack.c.b16 %v2519, %v2518
        %v2530 = vpack.c.b16 %v2521, %v2520
        %v2531 = vpack.c.b16 %v2523, %v2522
        %v2536 = vunpack.c.l.b16 %v2504
        %v2537 = vunpack.c.l.b16 %v2505
        %v2538 = vunpack.c.l.b16 %v2506
        %v2539 = vunpack.c.l.b16 %v2507
        %v2540 = vpack.c.b16 %v2537, %v2536
        %v2541 = vpack.c.b16 %v2539, %v2538
        %v2545 = vsel %vm985, %v2524, 0
        %v2548 = vsel %vm985, %v2525, 0
        %v2551 = vsel %vm985, %v2526, 0
        %v2554 = vsel %vm985, %v2527, 0
        %v2557 = vsel %vm985, %v2528, 0
        %v2560 = vsel %vm985, %v2529, 0
        %v2563 = vsel %vm985, %v2530, 0
        %v2566 = vsel %vm985, %v2531, 0
        %2568 = vmatpush.bf16.msra.mxu0 0
        %2569 = vmatpush.bf16.msra.mxu0 0
        %2570 = vmatpush.bf16.msra.mxu0 0
        %2571 = vmatpush.bf16.msra.mxu0 0
        %2572 = vmatpush.bf16.msra.mxu0 0
        %2573 = vmatpush.bf16.msra.mxu0 0
        %2574 = vmatpush.bf16.msra.mxu0 %v2541
        %2575 = vmatpush.bf16.msra.mxu0 %v2540
        %2576 = vmatmul.bf16.gmra.mxu0 %v2545
        %v2577 = vpop.f32.mrf.mxu0
        %v2578 = vadd.f32 0.0, %v2577
        %v2579 = vpop.f32.mrf.mxu0
        %v2580 = vadd.f32 0.0, %v2579
        %2581 = vmatmul.bf16.gmra.mxu0 %v2548
        %v2582 = vpop.f32.mrf.mxu0
        %v2583 = vadd.f32 0.0, %v2582
        %v2584 = vpop.f32.mrf.mxu0
        %v2585 = vadd.f32 0.0, %v2584
        %2586 = vmatmul.bf16.gmra.mxu0 %v2551
        %v2587 = vpop.f32.mrf.mxu0
        %v2588 = vadd.f32 0.0, %v2587
        %v2589 = vpop.f32.mrf.mxu0
        %v2590 = vadd.f32 0.0, %v2589
        %2591 = vmatmul.bf16.gmra.mxu0 %v2554
        %v2592 = vpop.f32.mrf.mxu0
        %v2593 = vadd.f32 0.0, %v2592
        %v2594 = vpop.f32.mrf.mxu0
        %v2595 = vadd.f32 0.0, %v2594
        %2596 = vmatmul.bf16.gmra.mxu0 %v2557
        %v2597 = vpop.f32.mrf.mxu0
        %v2598 = vadd.f32 0.0, %v2597
        %v2599 = vpop.f32.mrf.mxu0
        %v2600 = vadd.f32 0.0, %v2599
        %2601 = vmatmul.bf16.gmra.mxu0 %v2560
        %v2602 = vpop.f32.mrf.mxu0
        %v2603 = vadd.f32 0.0, %v2602
        %v2604 = vpop.f32.mrf.mxu0
        %v2605 = vadd.f32 0.0, %v2604
        %2606 = vmatmul.bf16.gmra.mxu0 %v2563
        %v2607 = vpop.f32.mrf.mxu0
        %v2608 = vadd.f32 0.0, %v2607
        %v2609 = vpop.f32.mrf.mxu0
        %v2610 = vadd.f32 0.0, %v2609
        %2611 = vmatmul.bf16.gmra.mxu0 %v2566
        %v2612 = vpop.f32.mrf.mxu0
        %v2613 = vadd.f32 0.0, %v2612
        %v2614 = vpop.f32.mrf.mxu0
        %v2615 = vadd.f32 0.0, %v2614
        %2616 = vdwg.mxu0
        %v2617 = vadd.f32 %v2272, %v2578
        %v2618 = vadd.f32 %v2273, %v2580
        %v2619 = vadd.f32 %v2274, %v2583
        %v2620 = vadd.f32 %v2275, %v2585
        %v2621 = vadd.f32 %v2276, %v2588
        %v2622 = vadd.f32 %v2277, %v2590
        %v2623 = vadd.f32 %v2278, %v2593
        %v2624 = vadd.f32 %v2279, %v2595
        %v2625 = vadd.f32 %v2280, %v2598
        %v2626 = vadd.f32 %v2281, %v2600
        %v2627 = vadd.f32 %v2282, %v2603
        %v2628 = vadd.f32 %v2283, %v2605
        %v2629 = vadd.f32 %v2284, %v2608
        %v2630 = vadd.f32 %v2285, %v2610
        %v2631 = vadd.f32 %v2286, %v2613
        %v2632 = vadd.f32 %v2287, %v2615
        %v2633 = vld [vmem:[%s2126] sm:$0xe]
        %v2634 = vld [vmem:[%s2126 + $0xc] sm:$0xe]
        %v2635 = vld [vmem:[%s2126 + $0x18] sm:$0xe]
        %v2636 = vld [vmem:[%s2126 + $0x24] sm:$0xe]
        %v2637 = vld [vmem:[%s2126 + $0x30] sm:$0xe]
        %v2638 = vld [vmem:[%s2126 + $0x3c] sm:$0xe]
        %v2639 = vld [vmem:[%s2126 + $0x48] sm:$0xe]
        %v2640 = vld [vmem:[%s2126 + $0x54] sm:$0xe]
        %v2665 = vrot.slane %v2633, 5
        %v2666 = vrot.slane %v2665, 4
        %v2667 = vrot.slane %v2289, 5
        %v2668 = vsel %vm1210, %v2666, %v2667
        %v2669 = vrot.slane %v2667, 4
        %v2670 = vrot.slane %v2290, 5
        %v2671 = vsel %vm1210, %v2669, %v2670
        %v2672 = vrot.slane %v2634, 5
        %v2673 = vrot.slane %v2672, 4
        %v2674 = vrot.slane %v2292, 5
        %v2675 = vsel %vm1210, %v2673, %v2674
        %v2676 = vrot.slane %v2674, 4
        %v2677 = vrot.slane %v2293, 5
        %v2678 = vsel %vm1210, %v2676, %v2677
        %v2679 = vrot.slane %v2635, 5
        %v2680 = vrot.slane %v2679, 4
        %v2681 = vrot.slane %v2295, 5
        %v2682 = vsel %vm1210, %v2680, %v2681
        %v2683 = vrot.slane %v2681, 4
        %v2684 = vrot.slane %v2296, 5
        %v2685 = vsel %vm1210, %v2683, %v2684
        %v2686 = vrot.slane %v2636, 5
        %v2687 = vrot.slane %v2686, 4
        %v2688 = vrot.slane %v2298, 5
        %v2689 = vsel %vm1210, %v2687, %v2688
        %v2690 = vrot.slane %v2688, 4
        %v2691 = vrot.slane %v2299, 5
        %v2692 = vsel %vm1210, %v2690, %v2691
        %v2693 = vrot.slane %v2637, 5
        %v2694 = vrot.slane %v2693, 4
        %v2695 = vrot.slane %v2301, 5
        %v2696 = vsel %vm1210, %v2694, %v2695
        %v2697 = vrot.slane %v2695, 4
        %v2698 = vrot.slane %v2302, 5
        %v2699 = vsel %vm1210, %v2697, %v2698
        %v2700 = vrot.slane %v2638, 5
        %v2701 = vrot.slane %v2700, 4
        %v2702 = vrot.slane %v2304, 5
        %v2703 = vsel %vm1210, %v2701, %v2702
        %v2704 = vrot.slane %v2702, 4
        %v2705 = vrot.slane %v2305, 5
        %v2706 = vsel %vm1210, %v2704, %v2705
        %v2707 = vrot.slane %v2639, 5
        %v2708 = vrot.slane %v2707, 4
        %v2709 = vrot.slane %v2307, 5
        %v2710 = vsel %vm1210, %v2708, %v2709
        %v2711 = vrot.slane %v2709, 4
        %v2712 = vrot.slane %v2308, 5
        %v2713 = vsel %vm1210, %v2711, %v2712
        %v2714 = vrot.slane %v2640, 5
        %v2715 = vrot.slane %v2714, 4
        %v2716 = vrot.slane %v2310, 5
        %v2717 = vsel %vm1210, %v2715, %v2716
        %v2718 = vrot.slane %v2716, 4
        %v2719 = vrot.slane %v2311, 5
        %v2720 = vsel %vm1210, %v2718, %v2719
        %v2721 = vld [vmem:[%s1 + $0x80] sm:$0xf]
        %v2722 = vld [vmem:[%s1 + $0x84] sm:$0xf]
        %v2723 = vld [vmem:[%s1 + $0x88] sm:$0xf]
        %v2724 = vld [vmem:[%s1 + $0x8c] sm:$0xf]
        %v2725 = vunpack.c.l.b16 %v2668
        %v2726 = vunpack.c.l.b16 %v2671
        %v2727 = vunpack.c.l.b16 %v2675
        %v2728 = vunpack.c.l.b16 %v2678
        %v2729 = vunpack.c.l.b16 %v2682
        %v2730 = vunpack.c.l.b16 %v2685
        %v2731 = vunpack.c.l.b16 %v2689
        %v2732 = vunpack.c.l.b16 %v2692
        %v2733 = vunpack.c.l.b16 %v2696
        %v2734 = vunpack.c.l.b16 %v2699
        %v2735 = vunpack.c.l.b16 %v2703
        %v2736 = vunpack.c.l.b16 %v2706
        %v2737 = vunpack.c.l.b16 %v2710
        %v2738 = vunpack.c.l.b16 %v2713
        %v2739 = vunpack.c.l.b16 %v2717
        %v2740 = vunpack.c.l.b16 %v2720
        %v2741 = vpack.c.b16 %v2726, %v2725
        %v2742 = vpack.c.b16 %v2728, %v2727
        %v2743 = vpack.c.b16 %v2730, %v2729
        %v2744 = vpack.c.b16 %v2732, %v2731
        %v2745 = vpack.c.b16 %v2734, %v2733
        %v2746 = vpack.c.b16 %v2736, %v2735
        %v2747 = vpack.c.b16 %v2738, %v2737
        %v2748 = vpack.c.b16 %v2740, %v2739
        %v2753 = vunpack.c.l.b16 %v2721
        %v2754 = vunpack.c.l.b16 %v2722
        %v2755 = vunpack.c.l.b16 %v2723
        %v2756 = vunpack.c.l.b16 %v2724
        %v2757 = vpack.c.b16 %v2754, %v2753
        %v2758 = vpack.c.b16 %v2756, %v2755
        %v2762 = vsel %vm985, %v2741, 0
        %v2765 = vsel %vm985, %v2742, 0
        %v2768 = vsel %vm985, %v2743, 0
        %v2771 = vsel %vm985, %v2744, 0
        %v2774 = vsel %vm985, %v2745, 0
        %v2777 = vsel %vm985, %v2746, 0
        %v2780 = vsel %vm985, %v2747, 0
        %v2783 = vsel %vm985, %v2748, 0
        %2785 = vmatpush.bf16.msra.mxu0 0
        %2786 = vmatpush.bf16.msra.mxu0 0
        %2787 = vmatpush.bf16.msra.mxu0 0
        %2788 = vmatpush.bf16.msra.mxu0 0
        %2789 = vmatpush.bf16.msra.mxu0 0
        %2790 = vmatpush.bf16.msra.mxu0 0
        %2791 = vmatpush.bf16.msra.mxu0 %v2758
        %2792 = vmatpush.bf16.msra.mxu0 %v2757
        %2793 = vmatmul.bf16.gmra.mxu0 %v2762
        %v2794 = vpop.f32.mrf.mxu0
        %v2795 = vadd.f32 0.0, %v2794
        %v2796 = vpop.f32.mrf.mxu0
        %v2797 = vadd.f32 0.0, %v2796
        %2798 = vmatmul.bf16.gmra.mxu0 %v2765
        %v2799 = vpop.f32.mrf.mxu0
        %v2800 = vadd.f32 0.0, %v2799
        %v2801 = vpop.f32.mrf.mxu0
        %v2802 = vadd.f32 0.0, %v2801
        %2803 = vmatmul.bf16.gmra.mxu0 %v2768
        %v2804 = vpop.f32.mrf.mxu0
        %v2805 = vadd.f32 0.0, %v2804
        %v2806 = vpop.f32.mrf.mxu0
        %v2807 = vadd.f32 0.0, %v2806
        %2808 = vmatmul.bf16.gmra.mxu0 %v2771
        %v2809 = vpop.f32.mrf.mxu0
        %v2810 = vadd.f32 0.0, %v2809
        %v2811 = vpop.f32.mrf.mxu0
        %v2812 = vadd.f32 0.0, %v2811
        %2813 = vmatmul.bf16.gmra.mxu0 %v2774
        %v2814 = vpop.f32.mrf.mxu0
        %v2815 = vadd.f32 0.0, %v2814
        %v2816 = vpop.f32.mrf.mxu0
        %v2817 = vadd.f32 0.0, %v2816
        %2818 = vmatmul.bf16.gmra.mxu0 %v2777
        %v2819 = vpop.f32.mrf.mxu0
        %v2820 = vadd.f32 0.0, %v2819
        %v2821 = vpop.f32.mrf.mxu0
        %v2822 = vadd.f32 0.0, %v2821
        %2823 = vmatmul.bf16.gmra.mxu0 %v2780
        %v2824 = vpop.f32.mrf.mxu0
        %v2825 = vadd.f32 0.0, %v2824
        %v2826 = vpop.f32.mrf.mxu0
        %v2827 = vadd.f32 0.0, %v2826
        %2828 = vmatmul.bf16.gmra.mxu0 %v2783
        %v2829 = vpop.f32.mrf.mxu0
        %v2830 = vadd.f32 0.0, %v2829
        %v2831 = vpop.f32.mrf.mxu0
        %v2832 = vadd.f32 0.0, %v2831
        %2833 = vdwg.mxu0
        %v2834 = vadd.f32 %v2617, %v2795
        %v2835 = vadd.f32 %v2618, %v2797
        %v2836 = vadd.f32 %v2619, %v2800
        %v2837 = vadd.f32 %v2620, %v2802
        %v2838 = vadd.f32 %v2621, %v2805
        %v2839 = vadd.f32 %v2622, %v2807
        %v2840 = vadd.f32 %v2623, %v2810
        %v2841 = vadd.f32 %v2624, %v2812
        %v2842 = vadd.f32 %v2625, %v2815
        %v2843 = vadd.f32 %v2626, %v2817
        %v2844 = vadd.f32 %v2627, %v2820
        %v2845 = vadd.f32 %v2628, %v2822
        %v2846 = vadd.f32 %v2629, %v2825
        %v2847 = vadd.f32 %v2630, %v2827
        %v2848 = vadd.f32 %v2631, %v2830
        %v2849 = vadd.f32 %v2632, %v2832
        %v2850 = vld [vmem:[%s2] sm:$0x1]
        %v2852 = vperm.slane %v2850, 0
        %v2854 = vadd.f32 %v2834, %v2852
        %v2855 = vadd.f32 %v2835, %v2852
        %v2856 = vadd.f32 %v2836, %v2852
        %v2857 = vadd.f32 %v2837, %v2852
        %v2858 = vadd.f32 %v2838, %v2852
        %v2859 = vadd.f32 %v2839, %v2852
        %v2860 = vadd.f32 %v2840, %v2852
        %v2861 = vadd.f32 %v2841, %v2852
        %v2862 = vadd.f32 %v2842, %v2852
        %v2863 = vadd.f32 %v2843, %v2852
        %v2864 = vadd.f32 %v2844, %v2852
        %v2865 = vadd.f32 %v2845, %v2852
        %v2866 = vadd.f32 %v2846, %v2852
        %v2867 = vadd.f32 %v2847, %v2852
        %v2868 = vadd.f32 %v2848, %v2852
        %v2869 = vadd.f32 %v2849, %v2852
        %v2870 = vmax.f32 %v2854, 0.0
        %v2871 = vmax.f32 %v2855, 0.0
        %v2872 = vmax.f32 %v2856, 0.0
        %v2873 = vmax.f32 %v2857, 0.0
        %v2874 = vmax.f32 %v2858, 0.0
        %v2875 = vmax.f32 %v2859, 0.0
        %v2876 = vmax.f32 %v2860, 0.0
        %v2877 = vmax.f32 %v2861, 0.0
        %v2878 = vmax.f32 %v2862, 0.0
        %v2879 = vmax.f32 %v2863, 0.0
        %v2880 = vmax.f32 %v2864, 0.0
        %v2881 = vmax.f32 %v2865, 0.0
        %v2882 = vmax.f32 %v2866, 0.0
        %v2883 = vmax.f32 %v2867, 0.0
        %v2884 = vmax.f32 %v2868, 0.0
        %v2885 = vmax.f32 %v2869, 0.0
        %2886 = vst [vmem:[%s177] sm:$0xff] %v2870
        %2887 = vst [vmem:[%s177 + $0x8] sm:$0xff] %v2871
        %2888 = vst [vmem:[%s177 + $0x10] sm:$0xff] %v2872
        %2889 = vst [vmem:[%s177 + $0x18] sm:$0xff] %v2873
        %2890 = vst [vmem:[%s177 + $0x20] sm:$0xff] %v2874
        %2891 = vst [vmem:[%s177 + $0x28] sm:$0xff] %v2875
        %2892 = vst [vmem:[%s177 + $0x30] sm:$0xff] %v2876
        %2893 = vst [vmem:[%s177 + $0x38] sm:$0xff] %v2877
        %2894 = vst [vmem:[%s177 + $0x40] sm:$0xff] %v2878
        %2895 = vst [vmem:[%s177 + $0x48] sm:$0xff] %v2879
        %2896 = vst [vmem:[%s177 + $0x50] sm:$0xff] %v2880
        %2897 = vst [vmem:[%s177 + $0x58] sm:$0xff] %v2881
        %2898 = vst [vmem:[%s177 + $0x60] sm:$0xff] %v2882
        %2899 = vst [vmem:[%s177 + $0x68] sm:$0xff] %v2883
        %2900 = vst [vmem:[%s177 + $0x70] sm:$0xff] %v2884
        %2901 = vst [vmem:[%s177 + $0x78] sm:$0xff] %v2885
        %s2902 = sand.u32 %s107, 1
        %s2903 = scalar_lea.sflag [#allocation4], %s2902
        %s2904 = sand.u32 %s107, 1
        %s2905 = smul.addr %s2904, 128
        %s2906 = scalar_lea.vmem [#allocation3], %s2905
        // Predicated region
        $region37: #{basic_conv2d_forward.1} parent=31 // pred_check
          %p2907 = pneg %p117
        $region38: #{basic_conv2d_forward.1} parent=31 // pred_check_branch
          %2909 = sbr.rel (%p2907) target = $region40
        $region39: #{basic_conv2d_forward.1} parent=31 // pred_region
          %s2910 = smul.u32 16, %s22
          %2912 = vsyncadd %s2903, 0
          %s2913 = smul.addr %s21, 32
          %s2914 = sadd.s32 %s2910, %s2913
          %s2915 = smul.addr %s2914, 8
          %s2916 = scalar_lea.hbm %s3, %s2915
          %s2917 = sshll.u32 %s2906, 4
          %s2918 = int_to_ptr.vmem [resolvable:$true] %s2917
          %s2919 = sshll.u32 %s2916, 4
          %s2920 = int_to_ptr.hbm [resolvable:$true] %s2919
          %2925 = dma.vmem_to_hbm [thread:$0]  %s2918, 2048, %s2920, %s2903, 128, 128, 8
        $region40: #{basic_conv2d_forward.1} parent=31 // pred_fallthru
          _
      $region32: #{basic_conv2d_forward.1} parent=5 // pred_fallthru
        _
      %p2926 = scmp.le.s32.totalorder 2, %s12
      // Predicated region
      $region41: #{basic_conv2d_forward.1} parent=5 // pred_check
        %p2927 = pneg %p2926
      $region42: #{basic_conv2d_forward.1} parent=5 // pred_check_branch
        %2929 = sbr.rel (%p2927) target = $region44
      $region43: #{basic_conv2d_forward.1} parent=5 // pred_region
        %s2930 = ssub.s32 %s12, 2
        // Predicated region
        $region45: #{basic_conv2d_forward.1} parent=43 // pred_check
          %p2931 = pneg %p123
        $region46: #{basic_conv2d_forward.1} parent=43 // pred_check_branch
          %2933 = sbr.rel (%p2931) target = $region48
        $region47: #{basic_conv2d_forward.1} parent=43 // pred_region
          %s2934 = sand.u32 %s108, 1
          %s2935 = scalar_lea.sflag [#allocation4], %s2934
          %s2936 = sand.u32 %s108, 1
          %s2937 = smul.addr %s2936, 128
          %s2938 = scalar_lea.vmem [#allocation3], %s2937
          %2940 = dma.done %s2935, 2048
        $region48: #{basic_conv2d_forward.1} parent=43 // pred_fallthru
          _
      $region44: #{basic_conv2d_forward.1} parent=5 // pred_fallthru
        _
    $region6: #{basic_conv2d_forward.1} parent=1 // loop_footer
      %s16 = sadd.s32 1, %s12
    $region7: #{basic_conv2d_forward.1} parent=1 // loop_footer_branch
      %11 = sbr.rel target = $region3
    $region8: #{basic_conv2d_forward.1} parent=1 // loop_exit
      _
    %2941 = vsyncpa [#allocation4], 1
    %s2942 = scalar_lea.sflag [#allocation4], 1
    %2943 = vsyncpa %s2942, 1

</llo_original>
